<compile_context>
chip_gen: v5e
topology: v5e:2x2
jax: 0.10.0
libtpu: 0.0.40
codegen_flags: <defaults>
</compile_context>

<pallas_src>
import jax
import jax.numpy as jnp
from jax.experimental import pallas as pl
from jax.experimental.pallas import tpu as pltpu


def _pick_tile_h(H, cap):
    """Largest divisor of H that is a multiple of 8 (or H itself) and <= cap."""
    cands = [d for d in range(1, H + 1) if H % d == 0 and (d % 8 == 0 or d == H)]
    fitting = [d for d in cands if d <= cap]
    return max(fitting) if fitting else min(cands)


def _largest_divisor_at_most(n, cap):
    cap = max(1, min(n, int(cap)))
    for d in range(cap, 0, -1):
        if n % d == 0:
            return d
    return 1


def carafe_pallas(features, masks, kernel_size, group_size, scale_factor,
                  *, tile_h=None, tile_c=None):
    N, C, H, W = features.shape
    ks = int(kernel_size)
    G = int(group_size)
    s = int(scale_factor)
    assert ks % 2 == 1, "kernel_size must be odd (matches mmcv CARAFE)"
    assert C % G == 0, "group_size must divide C"
    nc = C // G
    K2 = ks * ks
    pad = (ks - 1) // 2
    out_H, out_W = H * s, W * s
    Wp = W + 2 * pad
    Wps = Wp * s
    fsize = jnp.dtype(features.dtype).itemsize
    msize = jnp.dtype(masks.dtype).itemsize

    # ---- VMEM budget (generation aware: v7x 64 MiB/TC, v5e/v6e 128 MiB) ----
    try:
        vmem_cap = int(getattr(pltpu.get_tpu_info(), "vmem_capacity_bytes",
                               64 * 2**20))
    except Exception:
        vmem_cap = 64 * 2**20
    budget = int(0.6 * vmem_cap)          # leave headroom for double buffers/scratch

    # ---- tile selection ----
    if tile_h is None:
        mask_row_bytes = 2 * K2 * s * out_W * msize   # per input row, double-buffered
        cap_h = max(1, (budget // 4) // max(1, mask_row_bytes))
        tile_h = _pick_tile_h(H, min(cap_h, 32))
    tH = int(tile_h)
    assert H % tH == 0, "tile_h must divide H"
    nH = H // tH
    halo_rows = ks - 1 if ks > 1 else 1

    # in-kernel chunking (register-pressure knobs; does NOT change grid size)
    rc = min(tH, 8)                                            # row chunk
    cc = max(1, (112 * 1024) // max(1, (s + 1) * rc * out_W * 4))  # channel chunk

    if tile_c is None:
        per_c = 2 * (tH * Wps + halo_rows * Wps + tH * s * out_W) * fsize
        rem = max(per_c, budget - 2 * K2 * tH * s * out_W * msize)
        cap_c = max(1, rem // per_c)
        tile_c = _largest_divisor_at_most(nc, min(cap_c, 8 * cc))
    tnc = int(tile_c)
    assert nc % tnc == 0, "tile_c must divide C // group_size"
    nC = nc // tnc
    cc = min(cc, tnc)

    # ---- free view reshapes + cheap prep on the (smallest) feature tensor ----
    f = features.reshape(N, G, nc, H, W)
    # (out_H, out_W) -> (H, s*out_W) is a pure view: sub-row dh lives at lane
    # offset dh*out_W.  Same view is used for the output.
    m5 = masks.reshape(N, G, K2, H, s * out_W)
    fpw = jnp.repeat(
        jnp.pad(f, ((0, 0), (0, 0), (0, 0), (pad, pad), (pad, pad))),
        s, axis=-1)                                   # (N, G, nc, Hp, Wp*s)
    fmain = fpw[:, :, :, :H, :]                       # rows [0, H): halo-free main blocks
    if ks > 1:
        # bottom halo rows [hi*tH + tH, hi*tH + tH + ks - 1) for every H-tile
        fhalo = jnp.stack(
            [fpw[:, :, :, hi * tH + tH: hi * tH + tH + (ks - 1), :]
             for hi in range(nH)], axis=3)            # (N, G, nc, nH, ks-1, Wps)
    else:
        fhalo = jnp.zeros((N, G, nc, nH, 1, Wps), fpw.dtype)  # never read

    def kernel(fw_ref, fh_ref, m_ref, o_ref):
        # fw_ref: (tnc, tH, Wps)            main feature rows (padded + width-repeated)
        # fh_ref: (tnc, halo_rows, Wps)     bottom halo rows for this H-tile
        # m_ref : (K2, tH, s*out_W)         masks, sub-row dh at lane offset dh*out_W
        # o_ref : (tnc, tH, s*out_W)        output rows in the same free view
        fH = tH

        def tap(c0, lc, a, lr, j0):
            # feature rows [a, a+lr) of the logical (tH + ks - 1)-row padded slab,
            # lanes [j0, j0 + out_W), channels [c0, c0 + lc).  Static slices only.
            if a + lr <= fH:
                v = fw_ref[c0:c0 + lc, a:a + lr, j0:j0 + out_W]
            elif a >= fH:
                v = fh_ref[c0:c0 + lc, a - fH:a - fH + lr, j0:j0 + out_W]
            else:
                v = jnp.concatenate(
                    [fw_ref[c0:c0 + lc, a:fH, j0:j0 + out_W],
                     fh_ref[c0:c0 + lc, 0:a + lr - fH, j0:j0 + out_W]], axis=1)
            return v.astype(jnp.float32)

        for c0 in range(0, tnc, cc):
            lc = min(cc, tnc - c0)
            for r0 in range(0, tH, rc):
                lr = min(rc, tH - r0)
                accs = [jnp.zeros((lc, lr, out_W), jnp.float32) for _ in range(s)]
                for ki in range(ks):
                    for kj in range(ks):
                        k = ki * ks + kj
                        sh = tap(c0, lc, r0 + ki, lr, kj * s)
                        for dh in range(s):
                            mk = m_ref[k, r0:r0 + lr,
                                       dh * out_W:(dh + 1) * out_W].astype(jnp.float32)
                            accs[dh] = accs[dh] + sh * mk[None, :, :]
                out = jnp.concatenate(accs, axis=-1) if s > 1 else accs[0]
                o_ref[c0:c0 + lc, r0:r0 + lr, :] = out.astype(o_ref.dtype)

    blk_bytes = (2 * (tnc * tH * Wps + tnc * halo_rows * Wps
                      + tnc * tH * s * out_W) * fsize
                 + 2 * K2 * tH * s * out_W * msize)
    vmem_limit = int(min(0.85 * vmem_cap,
                         max(32 * 2**20, 1.5 * blk_bytes + 4 * 2**20)))
    vmem_limit = int(max(vmem_limit, blk_bytes + 2 * 2**20))

    cost = pl.CostEstimate(
        flops=2 * N * C * K2 * out_H * out_W,
        transcendentals=0,
        bytes_accessed=int(fmain.size * fsize + fhalo.size * fsize
                           + m5.size * msize + N * C * out_H * out_W * fsize))

    out5 = pl.pallas_call(
        kernel,
        out_shape=jax.ShapeDtypeStruct((N, G, nc, H, s * out_W), features.dtype),
        grid=(N, G, nH, nC),                   # channel tiles innermost: the mask
        in_specs=[                             # block is reused (no re-DMA) across them
            pl.BlockSpec((None, None, tnc, tH, Wps),
                         lambda n, g, hi, ci: (n, g, ci, hi, 0)),
            pl.BlockSpec((None, None, tnc, None, halo_rows, Wps),
                         lambda n, g, hi, ci: (n, g, ci, hi, 0, 0)),
            pl.BlockSpec((None, None, K2, tH, s * out_W),
                         lambda n, g, hi, ci: (n, g, 0, hi, 0)),
        ],
        out_specs=pl.BlockSpec((None, None, tnc, tH, s * out_W),
                               lambda n, g, hi, ci: (n, g, ci, hi, 0)),
        compiler_params=pltpu.CompilerParams(
            dimension_semantics=("parallel", "parallel", "parallel", "parallel"),
            vmem_limit_bytes=vmem_limit),
        cost_estimate=cost,
    )(fmain, fhalo, m5)

    # free view reshape: (N, G, nc, H, s*out_W) -> (N, C, out_H, out_W)
    return out5.reshape(N, C, out_H, out_W)


def carafe_reference(features, masks, kernel_size, group_size, scale_factor):
    """Plain-JAX reference mirroring the PyTorch carafe_forward semantics."""
    N, C, H, W = features.shape
    s = scale_factor
    G = group_size
    nc = C // G
    ks = kernel_size
    K2 = ks * ks
    pad = (ks - 1) // 2
    out_H, out_W = H * s, W * s

    fpad = jnp.pad(features, ((0, 0), (0, 0), (pad, pad), (pad, pad)))
    patches = jnp.stack(
        [fpad[:, :, ki:ki + H, kj:kj + W] for ki in range(ks) for kj in range(ks)],
        axis=2)                                                  # (N, C, K2, H, W)
    patches = jnp.repeat(jnp.repeat(patches, s, axis=3), s, axis=4)  # nearest upsample
    patches = patches.reshape(N, G, nc, K2, out_H, out_W)

    m = masks.reshape(N, G, K2, out_H, out_W)
    out = (patches * m[:, :, None]).sum(axis=3)
    return out.reshape(N, C, out_H, out_W)


if __name__ == "__main__":
    # Case 1: kernel_size=3, group_size=2, scale_factor=2
    kernel_size, group_size, scale_factor = 3, 2, 2
    N, C, H, W = 2, 8, 16, 16
    out_H, out_W = H * scale_factor, W * scale_factor
    K2 = kernel_size * kernel_size

    key = jax.random.PRNGKey(0)
    kf, km, kf2, km2 = jax.random.split(key, 4)
    features = jax.random.normal(kf, (N, C, H, W), dtype=jnp.float32)
    masks_raw = jax.random.normal(
        km, (N, K2 * group_size, out_H, out_W), dtype=jnp.float32)
    # CARAFE masks are softmax-normalized over the K^2 positions per group
    # (done by the caller; the kernel itself does not normalize).
    masks = jax.nn.softmax(
        masks_raw.reshape(N, group_size, K2, out_H, out_W), axis=2
    ).reshape(N, K2 * group_size, out_H, out_W)

    ref = carafe_reference(features, masks, kernel_size, group_size, scale_factor)

    # 1a) auto tiling
    out = jax.block_until_ready(
        carafe_pallas(features, masks, kernel_size, group_size, scale_factor))
    assert out.shape == (N, C, out_H, out_W)
    assert jnp.allclose(out, ref, atol=1e-5, rtol=1e-5), "mismatch (auto tiles)"

    # 1b) forced small tiles: exercises the H-tile grid, the halo input and the
    #     channel-tile grid with mask-block reuse.
    out_t = jax.block_until_ready(
        carafe_pallas(features, masks, kernel_size, group_size, scale_factor,
                      tile_h=8, tile_c=2))
    assert jnp.allclose(out_t, ref, atol=1e-5, rtol=1e-5), "mismatch (forced tiles)"

    # Case 2: kernel_size=5, group_size=1 (more taps, single group, bottom-pad halo)
    ks2, gs2, sf2 = 5, 1, 2
    N2, C2, H2, W2 = 1, 4, 8, 8
    oH2, oW2 = H2 * sf2, W2 * sf2
    K2b = ks2 * ks2
    features2 = jax.random.normal(kf2, (N2, C2, H2, W2), dtype=jnp.float32)
    masks2_raw = jax.random.normal(km2, (N2, K2b * gs2, oH2, oW2), dtype=jnp.float32)
    masks2 = jax.nn.softmax(
        masks2_raw.reshape(N2, gs2, K2b, oH2, oW2), axis=2
    ).reshape(N2, K2b * gs2, oH2, oW2)

    ref2 = carafe_reference(features2, masks2, ks2, gs2, sf2)
    out2 = jax.block_until_ready(carafe_pallas(features2, masks2, ks2, gs2, sf2))
    assert jnp.allclose(out2, ref2, atol=1e-5, rtol=1e-5), "mismatch (ks=5 case)"

    print("KERNEL_OK")
</pallas_src>

<mosaic_0001>
module attributes {stable_mosaic.version = 11 : i64} {
  func.func @kernel(%arg0: i32, %arg1: i32, %arg2: i32, %arg3: i32, %arg4: memref<1x1x4x16x36xf32, #tpu.memory_space<vmem>>, %arg5: memref<1x1x4x1x2x36xf32, #tpu.memory_space<vmem>>, %arg6: memref<1x1x9x16x64xf32, #tpu.memory_space<vmem>>, %arg7: memref<1x1x4x16x64xf32, #tpu.memory_space<vmem>>) attributes {dimension_semantics = [#tpu.dimension_semantics<parallel>, #tpu.dimension_semantics<parallel>, #tpu.dimension_semantics<parallel>, #tpu.dimension_semantics<parallel>], iteration_bounds = array<i64: 2, 2, 1, 1>, scalar_prefetch = 0 : i64, scratch_operands = 0 : i64, tpu.core_type = #tpu.core_type<tc>, window_params = [{transform_indices = @transform_0, window_bounds = array<i64: 1, 1, 4, 16, 36>}, {transform_indices = @transform_1, window_bounds = array<i64: 1, 1, 4, 1, 2, 36>}, {transform_indices = @transform_2, window_bounds = array<i64: 1, 1, 9, 16, 64>}, {transform_indices = @transform_3, window_bounds = array<i64: 1, 1, 4, 16, 64>}]} {
    %cst = arith.constant 0.000000e+00 : f32
    %0 = vector.broadcast %cst : f32 to vector<4x8x32xf32>
    %cst_0 = arith.constant 0.000000e+00 : f32
    %1 = vector.broadcast %cst_0 : f32 to vector<4x8x32xf32>
    %c0 = arith.constant 0 : index
    %c0_1 = arith.constant 0 : index
    %c0_2 = arith.constant 0 : index
    %c0_3 = arith.constant 0 : index
    %c0_4 = arith.constant 0 : index
    %2 = vector.load %arg4[%c0, %c0_1, %c0_2, %c0_3, %c0_4] : memref<1x1x4x16x36xf32, #tpu.memory_space<vmem>>, vector<1x1x4x8x32xf32>
    %3 = vector.shape_cast %2 : vector<1x1x4x8x32xf32> to vector<4x8x32xf32>
    %c0_5 = arith.constant 0 : index
    %c0_6 = arith.constant 0 : index
    %c0_7 = arith.constant 0 : index
    %c0_8 = arith.constant 0 : index
    %c0_9 = arith.constant 0 : index
    %4 = vector.load %arg6[%c0_5, %c0_6, %c0_7, %c0_8, %c0_9] : memref<1x1x9x16x64xf32, #tpu.memory_space<vmem>>, vector<1x1x1x8x32xf32>
    %5 = vector.shape_cast %4 : vector<1x1x1x8x32xf32> to vector<8x32xf32>
    %6 = vector.shape_cast %5 : vector<8x32xf32> to vector<1x8x32xf32>
    %7 = vector.broadcast %6 : vector<1x8x32xf32> to vector<4x8x32xf32>
    %8 = arith.mulf %3, %7 : vector<4x8x32xf32>
    %9 = arith.addf %0, %8 : vector<4x8x32xf32>
    %c0_10 = arith.constant 0 : index
    %c0_11 = arith.constant 0 : index
    %c0_12 = arith.constant 0 : index
    %c0_13 = arith.constant 0 : index
    %c32 = arith.constant 32 : index
    %10 = vector.load %arg6[%c0_10, %c0_11, %c0_12, %c0_13, %c32] : memref<1x1x9x16x64xf32, #tpu.memory_space<vmem>>, vector<1x1x1x8x32xf32>
    %11 = vector.shape_cast %10 : vector<1x1x1x8x32xf32> to vector<8x32xf32>
    %12 = vector.shape_cast %11 : vector<8x32xf32> to vector<1x8x32xf32>
    %13 = vector.broadcast %12 : vector<1x8x32xf32> to vector<4x8x32xf32>
    %14 = arith.mulf %3, %13 : vector<4x8x32xf32>
    %15 = arith.addf %1, %14 : vector<4x8x32xf32>
    %c0_14 = arith.constant 0 : index
    %c0_15 = arith.constant 0 : index
    %c0_16 = arith.constant 0 : index
    %c0_17 = arith.constant 0 : index
    %c2 = arith.constant 2 : index
    %16 = vector.load %arg4[%c0_14, %c0_15, %c0_16, %c0_17, %c2] : memref<1x1x4x16x36xf32, #tpu.memory_space<vmem>>, vector<1x1x4x8x32xf32>
    %17 = vector.shape_cast %16 : vector<1x1x4x8x32xf32> to vector<4x8x32xf32>
    %c0_18 = arith.constant 0 : index
    %c0_19 = arith.constant 0 : index
    %c1 = arith.constant 1 : index
    %c0_20 = arith.constant 0 : index
    %c0_21 = arith.constant 0 : index
    %18 = vector.load %arg6[%c0_18, %c0_19, %c1, %c0_20, %c0_21] : memref<1x1x9x16x64xf32, #tpu.memory_space<vmem>>, vector<1x1x1x8x32xf32>
    %19 = vector.shape_cast %18 : vector<1x1x1x8x32xf32> to vector<8x32xf32>
    %20 = vector.shape_cast %19 : vector<8x32xf32> to vector<1x8x32xf32>
    %21 = vector.broadcast %20 : vector<1x8x32xf32> to vector<4x8x32xf32>
    %22 = arith.mulf %17, %21 : vector<4x8x32xf32>
    %23 = arith.addf %9, %22 : vector<4x8x32xf32>
    %c0_22 = arith.constant 0 : index
    %c0_23 = arith.constant 0 : index
    %c1_24 = arith.constant 1 : index
    %c0_25 = arith.constant 0 : index
    %c32_26 = arith.constant 32 : index
    %24 = vector.load %arg6[%c0_22, %c0_23, %c1_24, %c0_25, %c32_26] : memref<1x1x9x16x64xf32, #tpu.memory_space<vmem>>, vector<1x1x1x8x32xf32>
    %25 = vector.shape_cast %24 : vector<1x1x1x8x32xf32> to vector<8x32xf32>
    %26 = vector.shape_cast %25 : vector<8x32xf32> to vector<1x8x32xf32>
    %27 = vector.broadcast %26 : vector<1x8x32xf32> to vector<4x8x32xf32>
    %28 = arith.mulf %17, %27 : vector<4x8x32xf32>
    %29 = arith.addf %15, %28 : vector<4x8x32xf32>
    %c0_27 = arith.constant 0 : index
    %c0_28 = arith.constant 0 : index
    %c0_29 = arith.constant 0 : index
    %c0_30 = arith.constant 0 : index
    %c4 = arith.constant 4 : index
    %30 = vector.load %arg4[%c0_27, %c0_28, %c0_29, %c0_30, %c4] : memref<1x1x4x16x36xf32, #tpu.memory_space<vmem>>, vector<1x1x4x8x32xf32>
    %31 = vector.shape_cast %30 : vector<1x1x4x8x32xf32> to vector<4x8x32xf32>
    %c0_31 = arith.constant 0 : index
    %c0_32 = arith.constant 0 : index
    %c2_33 = arith.constant 2 : index
    %c0_34 = arith.constant 0 : index
    %c0_35 = arith.constant 0 : index
    %32 = vector.load %arg6[%c0_31, %c0_32, %c2_33, %c0_34, %c0_35] : memref<1x1x9x16x64xf32, #tpu.memory_space<vmem>>, vector<1x1x1x8x32xf32>
    %33 = vector.shape_cast %32 : vector<1x1x1x8x32xf32> to vector<8x32xf32>
    %34 = vector.shape_cast %33 : vector<8x32xf32> to vector<1x8x32xf32>
    %35 = vector.broadcast %34 : vector<1x8x32xf32> to vector<4x8x32xf32>
    %36 = arith.mulf %31, %35 : vector<4x8x32xf32>
    %37 = arith.addf %23, %36 : vector<4x8x32xf32>
    %c0_36 = arith.constant 0 : index
    %c0_37 = arith.constant 0 : index
    %c2_38 = arith.constant 2 : index
    %c0_39 = arith.constant 0 : index
    %c32_40 = arith.constant 32 : index
    %38 = vector.load %arg6[%c0_36, %c0_37, %c2_38, %c0_39, %c32_40] : memref<1x1x9x16x64xf32, #tpu.memory_space<vmem>>, vector<1x1x1x8x32xf32>
    %39 = vector.shape_cast %38 : vector<1x1x1x8x32xf32> to vector<8x32xf32>
    %40 = vector.shape_cast %39 : vector<8x32xf32> to vector<1x8x32xf32>
    %41 = vector.broadcast %40 : vector<1x8x32xf32> to vector<4x8x32xf32>
    %42 = arith.mulf %31, %41 : vector<4x8x32xf32>
    %43 = arith.addf %29, %42 : vector<4x8x32xf32>
    %c0_41 = arith.constant 0 : index
    %c0_42 = arith.constant 0 : index
    %c0_43 = arith.constant 0 : index
    %c1_44 = arith.constant 1 : index
    %c0_45 = arith.constant 0 : index
    %44 = vector.load %arg4[%c0_41, %c0_42, %c0_43, %c1_44, %c0_45] : memref<1x1x4x16x36xf32, #tpu.memory_space<vmem>>, vector<1x1x4x8x32xf32>
    %45 = vector.shape_cast %44 : vector<1x1x4x8x32xf32> to vector<4x8x32xf32>
    %c0_46 = arith.constant 0 : index
    %c0_47 = arith.constant 0 : index
    %c3 = arith.constant 3 : index
    %c0_48 = arith.constant 0 : index
    %c0_49 = arith.constant 0 : index
    %46 = vector.load %arg6[%c0_46, %c0_47, %c3, %c0_48, %c0_49] : memref<1x1x9x16x64xf32, #tpu.memory_space<vmem>>, vector<1x1x1x8x32xf32>
    %47 = vector.shape_cast %46 : vector<1x1x1x8x32xf32> to vector<8x32xf32>
    %48 = vector.shape_cast %47 : vector<8x32xf32> to vector<1x8x32xf32>
    %49 = vector.broadcast %48 : vector<1x8x32xf32> to vector<4x8x32xf32>
    %50 = arith.mulf %45, %49 : vector<4x8x32xf32>
    %51 = arith.addf %37, %50 : vector<4x8x32xf32>
    %c0_50 = arith.constant 0 : index
    %c0_51 = arith.constant 0 : index
    %c3_52 = arith.constant 3 : index
    %c0_53 = arith.constant 0 : index
    %c32_54 = arith.constant 32 : index
    %52 = vector.load %arg6[%c0_50, %c0_51, %c3_52, %c0_53, %c32_54] : memref<1x1x9x16x64xf32, #tpu.memory_space<vmem>>, vector<1x1x1x8x32xf32>
    %53 = vector.shape_cast %52 : vector<1x1x1x8x32xf32> to vector<8x32xf32>
    %54 = vector.shape_cast %53 : vector<8x32xf32> to vector<1x8x32xf32>
    %55 = vector.broadcast %54 : vector<1x8x32xf32> to vector<4x8x32xf32>
    %56 = arith.mulf %45, %55 : vector<4x8x32xf32>
    %57 = arith.addf %43, %56 : vector<4x8x32xf32>
    %c0_55 = arith.constant 0 : index
    %c0_56 = arith.constant 0 : index
    %c0_57 = arith.constant 0 : index
    %c1_58 = arith.constant 1 : index
    %c2_59 = arith.constant 2 : index
    %58 = vector.load %arg4[%c0_55, %c0_56, %c0_57, %c1_58, %c2_59] : memref<1x1x4x16x36xf32, #tpu.memory_space<vmem>>, vector<1x1x4x8x32xf32>
    %59 = vector.shape_cast %58 : vector<1x1x4x8x32xf32> to vector<4x8x32xf32>
    %c0_60 = arith.constant 0 : index
    %c0_61 = arith.constant 0 : index
    %c4_62 = arith.constant 4 : index
    %c0_63 = arith.constant 0 : index
    %c0_64 = arith.constant 0 : index
    %60 = vector.load %arg6[%c0_60, %c0_61, %c4_62, %c0_63, %c0_64] : memref<1x1x9x16x64xf32, #tpu.memory_space<vmem>>, vector<1x1x1x8x32xf32>
    %61 = vector.shape_cast %60 : vector<1x1x1x8x32xf32> to vector<8x32xf32>
    %62 = vector.shape_cast %61 : vector<8x32xf32> to vector<1x8x32xf32>
    %63 = vector.broadcast %62 : vector<1x8x32xf32> to vector<4x8x32xf32>
    %64 = arith.mulf %59, %63 : vector<4x8x32xf32>
    %65 = arith.addf %51, %64 : vector<4x8x32xf32>
    %c0_65 = arith.constant 0 : index
    %c0_66 = arith.constant 0 : index
    %c4_67 = arith.constant 4 : index
    %c0_68 = arith.constant 0 : index
    %c32_69 = arith.constant 32 : index
    %66 = vector.load %arg6[%c0_65, %c0_66, %c4_67, %c0_68, %c32_69] : memref<1x1x9x16x64xf32, #tpu.memory_space<vmem>>, vector<1x1x1x8x32xf32>
    %67 = vector.shape_cast %66 : vector<1x1x1x8x32xf32> to vector<8x32xf32>
    %68 = vector.shape_cast %67 : vector<8x32xf32> to vector<1x8x32xf32>
    %69 = vector.broadcast %68 : vector<1x8x32xf32> to vector<4x8x32xf32>
    %70 = arith.mulf %59, %69 : vector<4x8x32xf32>
    %71 = arith.addf %57, %70 : vector<4x8x32xf32>
    %c0_70 = arith.constant 0 : index
    %c0_71 = arith.constant 0 : index
    %c0_72 = arith.constant 0 : index
    %c1_73 = arith.constant 1 : index
    %c4_74 = arith.constant 4 : index
    %72 = vector.load %arg4[%c0_70, %c0_71, %c0_72, %c1_73, %c4_74] : memref<1x1x4x16x36xf32, #tpu.memory_space<vmem>>, vector<1x1x4x8x32xf32>
    %73 = vector.shape_cast %72 : vector<1x1x4x8x32xf32> to vector<4x8x32xf32>
    %c0_75 = arith.constant 0 : index
    %c0_76 = arith.constant 0 : index
    %c5 = arith.constant 5 : index
    %c0_77 = arith.constant 0 : index
    %c0_78 = arith.constant 0 : index
    %74 = vector.load %arg6[%c0_75, %c0_76, %c5, %c0_77, %c0_78] : memref<1x1x9x16x64xf32, #tpu.memory_space<vmem>>, vector<1x1x1x8x32xf32>
    %75 = vector.shape_cast %74 : vector<1x1x1x8x32xf32> to vector<8x32xf32>
    %76 = vector.shape_cast %75 : vector<8x32xf32> to vector<1x8x32xf32>
    %77 = vector.broadcast %76 : vector<1x8x32xf32> to vector<4x8x32xf32>
    %78 = arith.mulf %73, %77 : vector<4x8x32xf32>
    %79 = arith.addf %65, %78 : vector<4x8x32xf32>
    %c0_79 = arith.constant 0 : index
    %c0_80 = arith.constant 0 : index
    %c5_81 = arith.constant 5 : index
    %c0_82 = arith.constant 0 : index
    %c32_83 = arith.constant 32 : index
    %80 = vector.load %arg6[%c0_79, %c0_80, %c5_81, %c0_82, %c32_83] : memref<1x1x9x16x64xf32, #tpu.memory_space<vmem>>, vector<1x1x1x8x32xf32>
    %81 = vector.shape_cast %80 : vector<1x1x1x8x32xf32> to vector<8x32xf32>
    %82 = vector.shape_cast %81 : vector<8x32xf32> to vector<1x8x32xf32>
    %83 = vector.broadcast %82 : vector<1x8x32xf32> to vector<4x8x32xf32>
    %84 = arith.mulf %73, %83 : vector<4x8x32xf32>
    %85 = arith.addf %71, %84 : vector<4x8x32xf32>
    %c0_84 = arith.constant 0 : index
    %c0_85 = arith.constant 0 : index
    %c0_86 = arith.constant 0 : index
    %c2_87 = arith.constant 2 : index
    %c0_88 = arith.constant 0 : index
    %86 = vector.load %arg4[%c0_84, %c0_85, %c0_86, %c2_87, %c0_88] : memref<1x1x4x16x36xf32, #tpu.memory_space<vmem>>, vector<1x1x4x8x32xf32>
    %87 = vector.shape_cast %86 : vector<1x1x4x8x32xf32> to vector<4x8x32xf32>
    %c0_89 = arith.constant 0 : index
    %c0_90 = arith.constant 0 : index
    %c6 = arith.constant 6 : index
    %c0_91 = arith.constant 0 : index
    %c0_92 = arith.constant 0 : index
    %88 = vector.load %arg6[%c0_89, %c0_90, %c6, %c0_91, %c0_92] : memref<1x1x9x16x64xf32, #tpu.memory_space<vmem>>, vector<1x1x1x8x32xf32>
    %89 = vector.shape_cast %88 : vector<1x1x1x8x32xf32> to vector<8x32xf32>
    %90 = vector.shape_cast %89 : vector<8x32xf32> to vector<1x8x32xf32>
    %91 = vector.broadcast %90 : vector<1x8x32xf32> to vector<4x8x32xf32>
    %92 = arith.mulf %87, %91 : vector<4x8x32xf32>
    %93 = arith.addf %79, %92 : vector<4x8x32xf32>
    %c0_93 = arith.constant 0 : index
    %c0_94 = arith.constant 0 : index
    %c6_95 = arith.constant 6 : index
    %c0_96 = arith.constant 0 : index
    %c32_97 = arith.constant 32 : index
    %94 = vector.load %arg6[%c0_93, %c0_94, %c6_95, %c0_96, %c32_97] : memref<1x1x9x16x64xf32, #tpu.memory_space<vmem>>, vector<1x1x1x8x32xf32>
    %95 = vector.shape_cast %94 : vector<1x1x1x8x32xf32> to vector<8x32xf32>
    %96 = vector.shape_cast %95 : vector<8x32xf32> to vector<1x8x32xf32>
    %97 = vector.broadcast %96 : vector<1x8x32xf32> to vector<4x8x32xf32>
    %98 = arith.mulf %87, %97 : vector<4x8x32xf32>
    %99 = arith.addf %85, %98 : vector<4x8x32xf32>
    %c0_98 = arith.constant 0 : index
    %c0_99 = arith.constant 0 : index
    %c0_100 = arith.constant 0 : index
    %c2_101 = arith.constant 2 : index
    %c2_102 = arith.constant 2 : index
    %100 = vector.load %arg4[%c0_98, %c0_99, %c0_100, %c2_101, %c2_102] : memref<1x1x4x16x36xf32, #tpu.memory_space<vmem>>, vector<1x1x4x8x32xf32>
    %101 = vector.shape_cast %100 : vector<1x1x4x8x32xf32> to vector<4x8x32xf32>
    %c0_103 = arith.constant 0 : index
    %c0_104 = arith.constant 0 : index
    %c7 = arith.constant 7 : index
    %c0_105 = arith.constant 0 : index
    %c0_106 = arith.constant 0 : index
    %102 = vector.load %arg6[%c0_103, %c0_104, %c7, %c0_105, %c0_106] : memref<1x1x9x16x64xf32, #tpu.memory_space<vmem>>, vector<1x1x1x8x32xf32>
    %103 = vector.shape_cast %102 : vector<1x1x1x8x32xf32> to vector<8x32xf32>
    %104 = vector.shape_cast %103 : vector<8x32xf32> to vector<1x8x32xf32>
    %105 = vector.broadcast %104 : vector<1x8x32xf32> to vector<4x8x32xf32>
    %106 = arith.mulf %101, %105 : vector<4x8x32xf32>
    %107 = arith.addf %93, %106 : vector<4x8x32xf32>
    %c0_107 = arith.constant 0 : index
    %c0_108 = arith.constant 0 : index
    %c7_109 = arith.constant 7 : index
    %c0_110 = arith.constant 0 : index
    %c32_111 = arith.constant 32 : index
    %108 = vector.load %arg6[%c0_107, %c0_108, %c7_109, %c0_110, %c32_111] : memref<1x1x9x16x64xf32, #tpu.memory_space<vmem>>, vector<1x1x1x8x32xf32>
    %109 = vector.shape_cast %108 : vector<1x1x1x8x32xf32> to vector<8x32xf32>
    %110 = vector.shape_cast %109 : vector<8x32xf32> to vector<1x8x32xf32>
    %111 = vector.broadcast %110 : vector<1x8x32xf32> to vector<4x8x32xf32>
    %112 = arith.mulf %101, %111 : vector<4x8x32xf32>
    %113 = arith.addf %99, %112 : vector<4x8x32xf32>
    %c0_112 = arith.constant 0 : index
    %c0_113 = arith.constant 0 : index
    %c0_114 = arith.constant 0 : index
    %c2_115 = arith.constant 2 : index
    %c4_116 = arith.constant 4 : index
    %114 = vector.load %arg4[%c0_112, %c0_113, %c0_114, %c2_115, %c4_116] : memref<1x1x4x16x36xf32, #tpu.memory_space<vmem>>, vector<1x1x4x8x32xf32>
    %115 = vector.shape_cast %114 : vector<1x1x4x8x32xf32> to vector<4x8x32xf32>
    %c0_117 = arith.constant 0 : index
    %c0_118 = arith.constant 0 : index
    %c8 = arith.constant 8 : index
    %c0_119 = arith.constant 0 : index
    %c0_120 = arith.constant 0 : index
    %116 = vector.load %arg6[%c0_117, %c0_118, %c8, %c0_119, %c0_120] : memref<1x1x9x16x64xf32, #tpu.memory_space<vmem>>, vector<1x1x1x8x32xf32>
    %117 = vector.shape_cast %116 : vector<1x1x1x8x32xf32> to vector<8x32xf32>
    %118 = vector.shape_cast %117 : vector<8x32xf32> to vector<1x8x32xf32>
    %119 = vector.broadcast %118 : vector<1x8x32xf32> to vector<4x8x32xf32>
    %120 = arith.mulf %115, %119 : vector<4x8x32xf32>
    %121 = arith.addf %107, %120 : vector<4x8x32xf32>
    %c0_121 = arith.constant 0 : index
    %c0_122 = arith.constant 0 : index
    %c8_123 = arith.constant 8 : index
    %c0_124 = arith.constant 0 : index
    %c32_125 = arith.constant 32 : index
    %122 = vector.load %arg6[%c0_121, %c0_122, %c8_123, %c0_124, %c32_125] : memref<1x1x9x16x64xf32, #tpu.memory_space<vmem>>, vector<1x1x1x8x32xf32>
    %123 = vector.shape_cast %122 : vector<1x1x1x8x32xf32> to vector<8x32xf32>
    %124 = vector.shape_cast %123 : vector<8x32xf32> to vector<1x8x32xf32>
    %125 = vector.broadcast %124 : vector<1x8x32xf32> to vector<4x8x32xf32>
    %126 = arith.mulf %115, %125 : vector<4x8x32xf32>
    %127 = arith.addf %113, %126 : vector<4x8x32xf32>
    %128 = tpu.concatenate %121, %127 in 2 : vector<4x8x32xf32>, vector<4x8x32xf32> -> vector<4x8x64xf32>
    %c0_126 = arith.constant 0 : index
    %c0_127 = arith.constant 0 : index
    %c0_128 = arith.constant 0 : index
    %c0_129 = arith.constant 0 : index
    %c0_130 = arith.constant 0 : index
    %129 = vector.load %arg7[%c0_126, %c0_127, %c0_128, %c0_129, %c0_130] : memref<1x1x4x16x64xf32, #tpu.memory_space<vmem>>, vector<1x1x4x8x64xf32>
    %130 = vector.shape_cast %129 : vector<1x1x4x8x64xf32> to vector<4x8x64xf32>
    %131 = vector.shape_cast %128 : vector<4x8x64xf32> to vector<1x1x4x8x64xf32>
    tpu.vector_store %arg7[%c0_126, %c0_127, %c0_128, %c0_129, %c0_130], %131 {strides = array<i32>} : memref<1x1x4x16x64xf32, #tpu.memory_space<vmem>>, vector<1x1x4x8x64xf32>,
    %cst_131 = arith.constant 0.000000e+00 : f32
    %132 = vector.broadcast %cst_131 : f32 to vector<4x8x32xf32>
    %cst_132 = arith.constant 0.000000e+00 : f32
    %133 = vector.broadcast %cst_132 : f32 to vector<4x8x32xf32>
    %c0_133 = arith.constant 0 : index
    %c0_134 = arith.constant 0 : index
    %c0_135 = arith.constant 0 : index
    %c8_136 = arith.constant 8 : index
    %c0_137 = arith.constant 0 : index
    %134 = vector.load %arg4[%c0_133, %c0_134, %c0_135, %c8_136, %c0_137] : memref<1x1x4x16x36xf32, #tpu.memory_space<vmem>>, vector<1x1x4x8x32xf32>
    %135 = vector.shape_cast %134 : vector<1x1x4x8x32xf32> to vector<4x8x32xf32>
    %c0_138 = arith.constant 0 : index
    %c0_139 = arith.constant 0 : index
    %c0_140 = arith.constant 0 : index
    %c8_141 = arith.constant 8 : index
    %c0_142 = arith.constant 0 : index
    %136 = vector.load %arg6[%c0_138, %c0_139, %c0_140, %c8_141, %c0_142] : memref<1x1x9x16x64xf32, #tpu.memory_space<vmem>>, vector<1x1x1x8x32xf32>
    %137 = vector.shape_cast %136 : vector<1x1x1x8x32xf32> to vector<8x32xf32>
    %138 = vector.shape_cast %137 : vector<8x32xf32> to vector<1x8x32xf32>
    %139 = vector.broadcast %138 : vector<1x8x32xf32> to vector<4x8x32xf32>
    %140 = arith.mulf %135, %139 : vector<4x8x32xf32>
    %141 = arith.addf %132, %140 : vector<4x8x32xf32>
    %c0_143 = arith.constant 0 : index
    %c0_144 = arith.constant 0 : index
    %c0_145 = arith.constant 0 : index
    %c8_146 = arith.constant 8 : index
    %c32_147 = arith.constant 32 : index
    %142 = vector.load %arg6[%c0_143, %c0_144, %c0_145, %c8_146, %c32_147] : memref<1x1x9x16x64xf32, #tpu.memory_space<vmem>>, vector<1x1x1x8x32xf32>
    %143 = vector.shape_cast %142 : vector<1x1x1x8x32xf32> to vector<8x32xf32>
    %144 = vector.shape_cast %143 : vector<8x32xf32> to vector<1x8x32xf32>
    %145 = vector.broadcast %144 : vector<1x8x32xf32> to vector<4x8x32xf32>
    %146 = arith.mulf %135, %145 : vector<4x8x32xf32>
    %147 = arith.addf %133, %146 : vector<4x8x32xf32>
    %c0_148 = arith.constant 0 : index
    %c0_149 = arith.constant 0 : index
    %c0_150 = arith.constant 0 : index
    %c8_151 = arith.constant 8 : index
    %c2_152 = arith.constant 2 : index
    %148 = vector.load %arg4[%c0_148, %c0_149, %c0_150, %c8_151, %c2_152] : memref<1x1x4x16x36xf32, #tpu.memory_space<vmem>>, vector<1x1x4x8x32xf32>
    %149 = vector.shape_cast %148 : vector<1x1x4x8x32xf32> to vector<4x8x32xf32>
    %c0_153 = arith.constant 0 : index
    %c0_154 = arith.constant 0 : index
    %c1_155 = arith.constant 1 : index
    %c8_156 = arith.constant 8 : index
    %c0_157 = arith.constant 0 : index
    %150 = vector.load %arg6[%c0_153, %c0_154, %c1_155, %c8_156, %c0_157] : memref<1x1x9x16x64xf32, #tpu.memory_space<vmem>>, vector<1x1x1x8x32xf32>
    %151 = vector.shape_cast %150 : vector<1x1x1x8x32xf32> to vector<8x32xf32>
    %152 = vector.shape_cast %151 : vector<8x32xf32> to vector<1x8x32xf32>
    %153 = vector.broadcast %152 : vector<1x8x32xf32> to vector<4x8x32xf32>
    %154 = arith.mulf %149, %153 : vector<4x8x32xf32>
    %155 = arith.addf %141, %154 : vector<4x8x32xf32>
    %c0_158 = arith.constant 0 : index
    %c0_159 = arith.constant 0 : index
    %c1_160 = arith.constant 1 : index
    %c8_161 = arith.constant 8 : index
    %c32_162 = arith.constant 32 : index
    %156 = vector.load %arg6[%c0_158, %c0_159, %c1_160, %c8_161, %c32_162] : memref<1x1x9x16x64xf32, #tpu.memory_space<vmem>>, vector<1x1x1x8x32xf32>
    %157 = vector.shape_cast %156 : vector<1x1x1x8x32xf32> to vector<8x32xf32>
    %158 = vector.shape_cast %157 : vector<8x32xf32> to vector<1x8x32xf32>
    %159 = vector.broadcast %158 : vector<1x8x32xf32> to vector<4x8x32xf32>
    %160 = arith.mulf %149, %159 : vector<4x8x32xf32>
    %161 = arith.addf %147, %160 : vector<4x8x32xf32>
    %c0_163 = arith.constant 0 : index
    %c0_164 = arith.constant 0 : index
    %c0_165 = arith.constant 0 : index
    %c8_166 = arith.constant 8 : index
    %c4_167 = arith.constant 4 : index
    %162 = vector.load %arg4[%c0_163, %c0_164, %c0_165, %c8_166, %c4_167] : memref<1x1x4x16x36xf32, #tpu.memory_space<vmem>>, vector<1x1x4x8x32xf32>
    %163 = vector.shape_cast %162 : vector<1x1x4x8x32xf32> to vector<4x8x32xf32>
    %c0_168 = arith.constant 0 : index
    %c0_169 = arith.constant 0 : index
    %c2_170 = arith.constant 2 : index
    %c8_171 = arith.constant 8 : index
    %c0_172 = arith.constant 0 : index
    %164 = vector.load %arg6[%c0_168, %c0_169, %c2_170, %c8_171, %c0_172] : memref<1x1x9x16x64xf32, #tpu.memory_space<vmem>>, vector<1x1x1x8x32xf32>
    %165 = vector.shape_cast %164 : vector<1x1x1x8x32xf32> to vector<8x32xf32>
    %166 = vector.shape_cast %165 : vector<8x32xf32> to vector<1x8x32xf32>
    %167 = vector.broadcast %166 : vector<1x8x32xf32> to vector<4x8x32xf32>
    %168 = arith.mulf %163, %167 : vector<4x8x32xf32>
    %169 = arith.addf %155, %168 : vector<4x8x32xf32>
    %c0_173 = arith.constant 0 : index
    %c0_174 = arith.constant 0 : index
    %c2_175 = arith.constant 2 : index
    %c8_176 = arith.constant 8 : index
    %c32_177 = arith.constant 32 : index
    %170 = vector.load %arg6[%c0_173, %c0_174, %c2_175, %c8_176, %c32_177] : memref<1x1x9x16x64xf32, #tpu.memory_space<vmem>>, vector<1x1x1x8x32xf32>
    %171 = vector.shape_cast %170 : vector<1x1x1x8x32xf32> to vector<8x32xf32>
    %172 = vector.shape_cast %171 : vector<8x32xf32> to vector<1x8x32xf32>
    %173 = vector.broadcast %172 : vector<1x8x32xf32> to vector<4x8x32xf32>
    %174 = arith.mulf %163, %173 : vector<4x8x32xf32>
    %175 = arith.addf %161, %174 : vector<4x8x32xf32>
    %c0_178 = arith.constant 0 : index
    %c0_179 = arith.constant 0 : index
    %c0_180 = arith.constant 0 : index
    %c9 = arith.constant 9 : index
    %c0_181 = arith.constant 0 : index
    %176 = vector.load %arg4[%c0_178, %c0_179, %c0_180, %c9, %c0_181] : memref<1x1x4x16x36xf32, #tpu.memory_space<vmem>>, vector<1x1x4x7x32xf32>
    %177 = vector.shape_cast %176 : vector<1x1x4x7x32xf32> to vector<4x7x32xf32>
    %c0_182 = arith.constant 0 : index
    %c0_183 = arith.constant 0 : index
    %c0_184 = arith.constant 0 : index
    %c0_185 = arith.constant 0 : index
    %c0_186 = arith.constant 0 : index
    %c0_187 = arith.constant 0 : index
    %178 = vector.load %arg5[%c0_182, %c0_183, %c0_184, %c0_185, %c0_186, %c0_187] : memref<1x1x4x1x2x36xf32, #tpu.memory_space<vmem>>, vector<1x1x4x1x1x32xf32>
    %179 = vector.shape_cast %178 : vector<1x1x4x1x1x32xf32> to vector<4x1x32xf32>
    %180 = tpu.concatenate %177, %179 in 1 : vector<4x7x32xf32>, vector<4x1x32xf32> -> vector<4x8x32xf32>
    %c0_188 = arith.constant 0 : index
    %c0_189 = arith.constant 0 : index
    %c3_190 = arith.constant 3 : index
    %c8_191 = arith.constant 8 : index
    %c0_192 = arith.constant 0 : index
    %181 = vector.load %arg6[%c0_188, %c0_189, %c3_190, %c8_191, %c0_192] : memref<1x1x9x16x64xf32, #tpu.memory_space<vmem>>, vector<1x1x1x8x32xf32>
    %182 = vector.shape_cast %181 : vector<1x1x1x8x32xf32> to vector<8x32xf32>
    %183 = vector.shape_cast %182 : vector<8x32xf32> to vector<1x8x32xf32>
    %184 = vector.broadcast %183 : vector<1x8x32xf32> to vector<4x8x32xf32>
    %185 = arith.mulf %180, %184 : vector<4x8x32xf32>
    %186 = arith.addf %169, %185 : vector<4x8x32xf32>
    %c0_193 = arith.constant 0 : index
    %c0_194 = arith.constant 0 : index
    %c3_195 = arith.constant 3 : index
    %c8_196 = arith.constant 8 : index
    %c32_197 = arith.constant 32 : index
    %187 = vector.load %arg6[%c0_193, %c0_194, %c3_195, %c8_196, %c32_197] : memref<1x1x9x16x64xf32, #tpu.memory_space<vmem>>, vector<1x1x1x8x32xf32>
    %188 = vector.shape_cast %187 : vector<1x1x1x8x32xf32> to vector<8x32xf32>
    %189 = vector.shape_cast %188 : vector<8x32xf32> to vector<1x8x32xf32>
    %190 = vector.broadcast %189 : vector<1x8x32xf32> to vector<4x8x32xf32>
    %191 = arith.mulf %180, %190 : vector<4x8x32xf32>
    %192 = arith.addf %175, %191 : vector<4x8x32xf32>
    %c0_198 = arith.constant 0 : index
    %c0_199 = arith.constant 0 : index
    %c0_200 = arith.constant 0 : index
    %c9_201 = arith.constant 9 : index
    %c2_202 = arith.constant 2 : index
    %193 = vector.load %arg4[%c0_198, %c0_199, %c0_200, %c9_201, %c2_202] : memref<1x1x4x16x36xf32, #tpu.memory_space<vmem>>, vector<1x1x4x7x32xf32>
    %194 = vector.shape_cast %193 : vector<1x1x4x7x32xf32> to vector<4x7x32xf32>
    %c0_203 = arith.constant 0 : index
    %c0_204 = arith.constant 0 : index
    %c0_205 = arith.constant 0 : index
    %c0_206 = arith.constant 0 : index
    %c0_207 = arith.constant 0 : index
    %c2_208 = arith.constant 2 : index
    %195 = vector.load %arg5[%c0_203, %c0_204, %c0_205, %c0_206, %c0_207, %c2_208] : memref<1x1x4x1x2x36xf32, #tpu.memory_space<vmem>>, vector<1x1x4x1x1x32xf32>
    %196 = vector.shape_cast %195 : vector<1x1x4x1x1x32xf32> to vector<4x1x32xf32>
    %197 = tpu.concatenate %194, %196 in 1 : vector<4x7x32xf32>, vector<4x1x32xf32> -> vector<4x8x32xf32>
    %c0_209 = arith.constant 0 : index
    %c0_210 = arith.constant 0 : index
    %c4_211 = arith.constant 4 : index
    %c8_212 = arith.constant 8 : index
    %c0_213 = arith.constant 0 : index
    %198 = vector.load %arg6[%c0_209, %c0_210, %c4_211, %c8_212, %c0_213] : memref<1x1x9x16x64xf32, #tpu.memory_space<vmem>>, vector<1x1x1x8x32xf32>
    %199 = vector.shape_cast %198 : vector<1x1x1x8x32xf32> to vector<8x32xf32>
    %200 = vector.shape_cast %199 : vector<8x32xf32> to vector<1x8x32xf32>
    %201 = vector.broadcast %200 : vector<1x8x32xf32> to vector<4x8x32xf32>
    %202 = arith.mulf %197, %201 : vector<4x8x32xf32>
    %203 = arith.addf %186, %202 : vector<4x8x32xf32>
    %c0_214 = arith.constant 0 : index
    %c0_215 = arith.constant 0 : index
    %c4_216 = arith.constant 4 : index
    %c8_217 = arith.constant 8 : index
    %c32_218 = arith.constant 32 : index
    %204 = vector.load %arg6[%c0_214, %c0_215, %c4_216, %c8_217, %c32_218] : memref<1x1x9x16x64xf32, #tpu.memory_space<vmem>>, vector<1x1x1x8x32xf32>
    %205 = vector.shape_cast %204 : vector<1x1x1x8x32xf32> to vector<8x32xf32>
    %206 = vector.shape_cast %205 : vector<8x32xf32> to vector<1x8x32xf32>
    %207 = vector.broadcast %206 : vector<1x8x32xf32> to vector<4x8x32xf32>
    %208 = arith.mulf %197, %207 : vector<4x8x32xf32>
    %209 = arith.addf %192, %208 : vector<4x8x32xf32>
    %c0_219 = arith.constant 0 : index
    %c0_220 = arith.constant 0 : index
    %c0_221 = arith.constant 0 : index
    %c9_222 = arith.constant 9 : index
    %c4_223 = arith.constant 4 : index
    %210 = vector.load %arg4[%c0_219, %c0_220, %c0_221, %c9_222, %c4_223] : memref<1x1x4x16x36xf32, #tpu.memory_space<vmem>>, vector<1x1x4x7x32xf32>
    %211 = vector.shape_cast %210 : vector<1x1x4x7x32xf32> to vector<4x7x32xf32>
    %c0_224 = arith.constant 0 : index
    %c0_225 = arith.constant 0 : index
    %c0_226 = arith.constant 0 : index
    %c0_227 = arith.constant 0 : index
    %c0_228 = arith.constant 0 : index
    %c4_229 = arith.constant 4 : index
    %212 = vector.load %arg5[%c0_224, %c0_225, %c0_226, %c0_227, %c0_228, %c4_229] : memref<1x1x4x1x2x36xf32, #tpu.memory_space<vmem>>, vector<1x1x4x1x1x32xf32>
    %213 = vector.shape_cast %212 : vector<1x1x4x1x1x32xf32> to vector<4x1x32xf32>
    %214 = tpu.concatenate %211, %213 in 1 : vector<4x7x32xf32>, vector<4x1x32xf32> -> vector<4x8x32xf32>
    %c0_230 = arith.constant 0 : index
    %c0_231 = arith.constant 0 : index
    %c5_232 = arith.constant 5 : index
    %c8_233 = arith.constant 8 : index
    %c0_234 = arith.constant 0 : index
    %215 = vector.load %arg6[%c0_230, %c0_231, %c5_232, %c8_233, %c0_234] : memref<1x1x9x16x64xf32, #tpu.memory_space<vmem>>, vector<1x1x1x8x32xf32>
    %216 = vector.shape_cast %215 : vector<1x1x1x8x32xf32> to vector<8x32xf32>
    %217 = vector.shape_cast %216 : vector<8x32xf32> to vector<1x8x32xf32>
    %218 = vector.broadcast %217 : vector<1x8x32xf32> to vector<4x8x32xf32>
    %219 = arith.mulf %214, %218 : vector<4x8x32xf32>
    %220 = arith.addf %203, %219 : vector<4x8x32xf32>
    %c0_235 = arith.constant 0 : index
    %c0_236 = arith.constant 0 : index
    %c5_237 = arith.constant 5 : index
    %c8_238 = arith.constant 8 : index
    %c32_239 = arith.constant 32 : index
    %221 = vector.load %arg6[%c0_235, %c0_236, %c5_237, %c8_238, %c32_239] : memref<1x1x9x16x64xf32, #tpu.memory_space<vmem>>, vector<1x1x1x8x32xf32>
    %222 = vector.shape_cast %221 : vector<1x1x1x8x32xf32> to vector<8x32xf32>
    %223 = vector.shape_cast %222 : vector<8x32xf32> to vector<1x8x32xf32>
    %224 = vector.broadcast %223 : vector<1x8x32xf32> to vector<4x8x32xf32>
    %225 = arith.mulf %214, %224 : vector<4x8x32xf32>
    %226 = arith.addf %209, %225 : vector<4x8x32xf32>
    %c0_240 = arith.constant 0 : index
    %c0_241 = arith.constant 0 : index
    %c0_242 = arith.constant 0 : index
    %c10 = arith.constant 10 : index
    %c0_243 = arith.constant 0 : index
    %227 = vector.load %arg4[%c0_240, %c0_241, %c0_242, %c10, %c0_243] : memref<1x1x4x16x36xf32, #tpu.memory_space<vmem>>, vector<1x1x4x6x32xf32>
    %228 = vector.shape_cast %227 : vector<1x1x4x6x32xf32> to vector<4x6x32xf32>
    %c0_244 = arith.constant 0 : index
    %c0_245 = arith.constant 0 : index
    %c0_246 = arith.constant 0 : index
    %c0_247 = arith.constant 0 : index
    %c0_248 = arith.constant 0 : index
    %c0_249 = arith.constant 0 : index
    %229 = vector.load %arg5[%c0_244, %c0_245, %c0_246, %c0_247, %c0_248, %c0_249] : memref<1x1x4x1x2x36xf32, #tpu.memory_space<vmem>>, vector<1x1x4x1x2x32xf32>
    %230 = vector.shape_cast %229 : vector<1x1x4x1x2x32xf32> to vector<4x2x32xf32>
    %231 = tpu.concatenate %228, %230 in 1 : vector<4x6x32xf32>, vector<4x2x32xf32> -> vector<4x8x32xf32>
    %c0_250 = arith.constant 0 : index
    %c0_251 = arith.constant 0 : index
    %c6_252 = arith.constant 6 : index
    %c8_253 = arith.constant 8 : index
    %c0_254 = arith.constant 0 : index
    %232 = vector.load %arg6[%c0_250, %c0_251, %c6_252, %c8_253, %c0_254] : memref<1x1x9x16x64xf32, #tpu.memory_space<vmem>>, vector<1x1x1x8x32xf32>
    %233 = vector.shape_cast %232 : vector<1x1x1x8x32xf32> to vector<8x32xf32>
    %234 = vector.shape_cast %233 : vector<8x32xf32> to vector<1x8x32xf32>
    %235 = vector.broadcast %234 : vector<1x8x32xf32> to vector<4x8x32xf32>
    %236 = arith.mulf %231, %235 : vector<4x8x32xf32>
    %237 = arith.addf %220, %236 : vector<4x8x32xf32>
    %c0_255 = arith.constant 0 : index
    %c0_256 = arith.constant 0 : index
    %c6_257 = arith.constant 6 : index
    %c8_258 = arith.constant 8 : index
    %c32_259 = arith.constant 32 : index
    %238 = vector.load %arg6[%c0_255, %c0_256, %c6_257, %c8_258, %c32_259] : memref<1x1x9x16x64xf32, #tpu.memory_space<vmem>>, vector<1x1x1x8x32xf32>
    %239 = vector.shape_cast %238 : vector<1x1x1x8x32xf32> to vector<8x32xf32>
    %240 = vector.shape_cast %239 : vector<8x32xf32> to vector<1x8x32xf32>
    %241 = vector.broadcast %240 : vector<1x8x32xf32> to vector<4x8x32xf32>
    %242 = arith.mulf %231, %241 : vector<4x8x32xf32>
    %243 = arith.addf %226, %242 : vector<4x8x32xf32>
    %c0_260 = arith.constant 0 : index
    %c0_261 = arith.constant 0 : index
    %c0_262 = arith.constant 0 : index
    %c10_263 = arith.constant 10 : index
    %c2_264 = arith.constant 2 : index
    %244 = vector.load %arg4[%c0_260, %c0_261, %c0_262, %c10_263, %c2_264] : memref<1x1x4x16x36xf32, #tpu.memory_space<vmem>>, vector<1x1x4x6x32xf32>
    %245 = vector.shape_cast %244 : vector<1x1x4x6x32xf32> to vector<4x6x32xf32>
    %c0_265 = arith.constant 0 : index
    %c0_266 = arith.constant 0 : index
    %c0_267 = arith.constant 0 : index
    %c0_268 = arith.constant 0 : index
    %c0_269 = arith.constant 0 : index
    %c2_270 = arith.constant 2 : index
    %246 = vector.load %arg5[%c0_265, %c0_266, %c0_267, %c0_268, %c0_269, %c2_270] : memref<1x1x4x1x2x36xf32, #tpu.memory_space<vmem>>, vector<1x1x4x1x2x32xf32>
    %247 = vector.shape_cast %246 : vector<1x1x4x1x2x32xf32> to vector<4x2x32xf32>
    %248 = tpu.concatenate %245, %247 in 1 : vector<4x6x32xf32>, vector<4x2x32xf32> -> vector<4x8x32xf32>
    %c0_271 = arith.constant 0 : index
    %c0_272 = arith.constant 0 : index
    %c7_273 = arith.constant 7 : index
    %c8_274 = arith.constant 8 : index
    %c0_275 = arith.constant 0 : index
    %249 = vector.load %arg6[%c0_271, %c0_272, %c7_273, %c8_274, %c0_275] : memref<1x1x9x16x64xf32, #tpu.memory_space<vmem>>, vector<1x1x1x8x32xf32>
    %250 = vector.shape_cast %249 : vector<1x1x1x8x32xf32> to vector<8x32xf32>
    %251 = vector.shape_cast %250 : vector<8x32xf32> to vector<1x8x32xf32>
    %252 = vector.broadcast %251 : vector<1x8x32xf32> to vector<4x8x32xf32>
    %253 = arith.mulf %248, %252 : vector<4x8x32xf32>
    %254 = arith.addf %237, %253 : vector<4x8x32xf32>
    %c0_276 = arith.constant 0 : index
    %c0_277 = arith.constant 0 : index
    %c7_278 = arith.constant 7 : index
    %c8_279 = arith.constant 8 : index
    %c32_280 = arith.constant 32 : index
    %255 = vector.load %arg6[%c0_276, %c0_277, %c7_278, %c8_279, %c32_280] : memref<1x1x9x16x64xf32, #tpu.memory_space<vmem>>, vector<1x1x1x8x32xf32>
    %256 = vector.shape_cast %255 : vector<1x1x1x8x32xf32> to vector<8x32xf32>
    %257 = vector.shape_cast %256 : vector<8x32xf32> to vector<1x8x32xf32>
    %258 = vector.broadcast %257 : vector<1x8x32xf32> to vector<4x8x32xf32>
    %259 = arith.mulf %248, %258 : vector<4x8x32xf32>
    %260 = arith.addf %243, %259 : vector<4x8x32xf32>
    %c0_281 = arith.constant 0 : index
    %c0_282 = arith.constant 0 : index
    %c0_283 = arith.constant 0 : index
    %c10_284 = arith.constant 10 : index
    %c4_285 = arith.constant 4 : index
    %261 = vector.load %arg4[%c0_281, %c0_282, %c0_283, %c10_284, %c4_285] : memref<1x1x4x16x36xf32, #tpu.memory_space<vmem>>, vector<1x1x4x6x32xf32>
    %262 = vector.shape_cast %261 : vector<1x1x4x6x32xf32> to vector<4x6x32xf32>
    %c0_286 = arith.constant 0 : index
    %c0_287 = arith.constant 0 : index
    %c0_288 = arith.constant 0 : index
    %c0_289 = arith.constant 0 : index
    %c0_290 = arith.constant 0 : index
    %c4_291 = arith.constant 4 : index
    %263 = vector.load %arg5[%c0_286, %c0_287, %c0_288, %c0_289, %c0_290, %c4_291] : memref<1x1x4x1x2x36xf32, #tpu.memory_space<vmem>>, vector<1x1x4x1x2x32xf32>
    %264 = vector.shape_cast %263 : vector<1x1x4x1x2x32xf32> to vector<4x2x32xf32>
    %265 = tpu.concatenate %262, %264 in 1 : vector<4x6x32xf32>, vector<4x2x32xf32> -> vector<4x8x32xf32>
    %c0_292 = arith.constant 0 : index
    %c0_293 = arith.constant 0 : index
    %c8_294 = arith.constant 8 : index
    %c8_295 = arith.constant 8 : index
    %c0_296 = arith.constant 0 : index
    %266 = vector.load %arg6[%c0_292, %c0_293, %c8_294, %c8_295, %c0_296] : memref<1x1x9x16x64xf32, #tpu.memory_space<vmem>>, vector<1x1x1x8x32xf32>
    %267 = vector.shape_cast %266 : vector<1x1x1x8x32xf32> to vector<8x32xf32>
    %268 = vector.shape_cast %267 : vector<8x32xf32> to vector<1x8x32xf32>
    %269 = vector.broadcast %268 : vector<1x8x32xf32> to vector<4x8x32xf32>
    %270 = arith.mulf %265, %269 : vector<4x8x32xf32>
    %271 = arith.addf %254, %270 : vector<4x8x32xf32>
    %c0_297 = arith.constant 0 : index
    %c0_298 = arith.constant 0 : index
    %c8_299 = arith.constant 8 : index
    %c8_300 = arith.constant 8 : index
    %c32_301 = arith.constant 32 : index
    %272 = vector.load %arg6[%c0_297, %c0_298, %c8_299, %c8_300, %c32_301] : memref<1x1x9x16x64xf32, #tpu.memory_space<vmem>>, vector<1x1x1x8x32xf32>
    %273 = vector.shape_cast %272 : vector<1x1x1x8x32xf32> to vector<8x32xf32>
    %274 = vector.shape_cast %273 : vector<8x32xf32> to vector<1x8x32xf32>
    %275 = vector.broadcast %274 : vector<1x8x32xf32> to vector<4x8x32xf32>
    %276 = arith.mulf %265, %275 : vector<4x8x32xf32>
    %277 = arith.addf %260, %276 : vector<4x8x32xf32>
    %278 = tpu.concatenate %271, %277 in 2 : vector<4x8x32xf32>, vector<4x8x32xf32> -> vector<4x8x64xf32>
    %c0_302 = arith.constant 0 : index
    %c0_303 = arith.constant 0 : index
    %c0_304 = arith.constant 0 : index
    %c8_305 = arith.constant 8 : index
    %c0_306 = arith.constant 0 : index
    %279 = vector.load %arg7[%c0_302, %c0_303, %c0_304, %c8_305, %c0_306] : memref<1x1x4x16x64xf32, #tpu.memory_space<vmem>>, vector<1x1x4x8x64xf32>
    %280 = vector.shape_cast %279 : vector<1x1x4x8x64xf32> to vector<4x8x64xf32>
    %281 = vector.shape_cast %278 : vector<4x8x64xf32> to vector<1x1x4x8x64xf32>
    tpu.vector_store %arg7[%c0_302, %c0_303, %c0_304, %c8_305, %c0_306], %281 {strides = array<i32>} : memref<1x1x4x16x64xf32, #tpu.memory_space<vmem>>, vector<1x1x4x8x64xf32>,
    return
  }
  func.func @transform_0(%arg0: i32, %arg1: i32, %arg2: i32, %arg3: i32) -> (i32, i32, i32, i32, i32) {
    %c0_i32 = arith.constant 0 : i32
    %c0_i32_0 = arith.constant 0 : i32
    return %arg0, %arg1, %arg3, %arg2, %c0_i32 : i32, i32, i32, i32, i32
  }
  func.func @transform_1(%arg0: i32, %arg1: i32, %arg2: i32, %arg3: i32) -> (i32, i32, i32, i32, i32, i32) {
    %c0_i32 = arith.constant 0 : i32
    %c0_i32_0 = arith.constant 0 : i32
    %c0_i32_1 = arith.constant 0 : i32
    return %arg0, %arg1, %arg3, %arg2, %c0_i32, %c0_i32_0 : i32, i32, i32, i32, i32, i32
  }
  func.func @transform_2(%arg0: i32, %arg1: i32, %arg2: i32, %arg3: i32) -> (i32, i32, i32, i32, i32) {
    %c0_i32 = arith.constant 0 : i32
    %c0_i32_0 = arith.constant 0 : i32
    %c0_i32_1 = arith.constant 0 : i32
    return %arg0, %arg1, %c0_i32, %arg2, %c0_i32_0 : i32, i32, i32, i32, i32
  }
  func.func @transform_3(%arg0: i32, %arg1: i32, %arg2: i32, %arg3: i32) -> (i32, i32, i32, i32, i32) {
    %c0_i32 = arith.constant 0 : i32
    %c0_i32_0 = arith.constant 0 : i32
    return %arg0, %arg1, %arg3, %arg2, %c0_i32 : i32, i32, i32, i32, i32
  }
}

</mosaic_0001>

<llo_original>
// kernel: tpu_custom_call.1
$region0: #{tpu_custom_call.1}
  #allocation0 [shape = 'u32[]', space=smem, size = 0x4, offset = 0x4, fixed_abs, tag = 'smem constant byte address 0x4 - core index']
  #allocation1 [shape = 'u32[72,128]{1,0:T(1,128)}', space=vmem, size = 0x9000, scoped, tag = 'internal scratch']
  %s0 = inlined_call_operand.hbm [shape: f32[2,2,4,16,36], index: 0, kind: input, shape index: {}]
  %s1 = inlined_call_operand.hbm [shape: f32[2,2,4,1,2,36], index: 1, kind: input, shape index: {}]
  %s2 = inlined_call_operand.hbm [shape: f32[2,2,9,16,64], index: 2, kind: input, shape index: {}]
  %s3 = inlined_call_operand.hbm [shape: f32[2,2,4,16,64], index: 3, kind: output, shape index: {}]
  %s4 = sld [smem:[#allocation0]]
  $region57: #{tpu_custom_call.1} parent=0
    _
  %s6 = ssub.s32 1, %s4
  %s7 = scalar_select 0, %s6, %s4
  $region1: #{tpu_custom_call.1} parent=0
    #allocation2 [shape = 'u8[65536]{0}', space=vmem, size = 0x10000, scoped, tag = 'input window, operand 0']
    #allocation3 [shape = 's32[2]{0}', space=sflag, size = 0x8, scoped, tag = 'scoped memory for tpu_custom_call.1']
    #allocation4 [shape = 's32[2]{0}', space=sflag, size = 0x8, scoped, tag = 'scoped memory for tpu_custom_call.1']
    #allocation5 [shape = 'u8[8192]{0}', space=vmem, size = 0x2000, scoped, tag = 'input window, operand 1']
    #allocation6 [shape = 's32[2]{0}', space=sflag, size = 0x8, scoped, tag = 'scoped memory for tpu_custom_call.1']
    #allocation7 [shape = 'u8[147456]{0}', space=vmem, size = 0x24000, scoped, tag = 'input window, operand 2']
    #allocation8 [shape = 'u8[65536]{0}', space=vmem, size = 0x10000, scoped, tag = 'output window, operand 0']
    %8 = vsyncpa [#allocation3], 0
    %s9 = scalar_lea.sflag [#allocation3], 1
    %10 = vsyncpa %s9, 0
    %11 = vsyncpa [#allocation6], 0
    %s12 = scalar_lea.sflag [#allocation6], 1
    %13 = vsyncpa %s12, 0
    %14 = vsyncpa [#allocation4], 0
    %s15 = scalar_lea.sflag [#allocation4], 1
    %16 = vsyncpa %s15, 0
    loop: start=0, step=1, limit=6
    $region2: #{tpu_custom_call.1} parent=1 // loop_pre_header
      _
    $region3: #{tpu_custom_call.1} parent=1 // loop_header
      %s18 = sphi 0, %s22
      %p19 = scmp.ge.s32.totalorder %s18, 6
      %s25 = sphi 0, %s51
      %s26 = sphi 0, %s47
      %s27 = sphi 0, %s43
      %s28 = sphi 0, %s39
      %s29 = sphi 0, %s25
      %s30 = sphi 0, %s26
      %s31 = sphi 0, %s27
      %s32 = sphi 0, %s28
      %s33 = sphi 0, %s29
      %s34 = sphi 0, %s30
      %s35 = sphi 0, %s31
      %s36 = sphi 0, %s32
      %s60 = sphi 0, %s62
      %s63 = sphi 0, %s60
      %s64 = sphi 0, %s63
      %s80 = sphi 0, %s64
      %s92 = sphi 0, %s94
      %s95 = sphi 0, %s92
      %s96 = sphi 0, %s95
      %s112 = sphi 0, %s96
      %s122 = sphi 0, %s124
      %s125 = sphi 0, %s122
      %s126 = sphi 0, %s125
      %s142 = sphi 0, %s126
      %s154 = sphi 0, %s156
      %s157 = sphi 0, %s154
      %s158 = sphi 0, %s157
      %s174 = sphi 0, %s158
    $region4: #{tpu_custom_call.1} parent=1 // loop_header_branch
      %21 = sbr.rel (%p19) target = $region8
    $region5: #{tpu_custom_call.1} parent=1 // loop_body
      %s23 = ssub.s32 %s18, 1
      %s24 = ssub.s32 %s18, 2
      %s37 = sadd.s32 1, %s28
      %p38 = scmp.ge.s32.totalorder %s37, 1
      %s39 = scalar_select %p38, 0, %s37
      %s40 = sadd.s32 1, %s27
      %s41 = scalar_select %p38, %s40, %s27
      %p42 = scmp.ge.s32.totalorder %s41, 1
      %s43 = scalar_select %p42, 0, %s41
      %s44 = sadd.s32 1, %s26
      %s45 = scalar_select %p42, %s44, %s26
      %p46 = scmp.ge.s32.totalorder %s45, 2
      %s47 = scalar_select %p46, 0, %s45
      %s48 = sadd.s32 1, %s25
      %s49 = scalar_select %p46, %s48, %s25
      %p50 = scmp.ge.s32.totalorder %s49, 2
      %s51 = scalar_select %p50, 0, %s49
      %s52 = ssub.s32 %s25, %s51
      %s53 = ssub.s32 %s26, %s47
      %s54 = sor.u32 %s52, %s53
      %s55 = ssub.s32 %s28, %s39
      %s56 = sor.u32 %s54, %s55
      %s57 = ssub.s32 %s27, %s43
      %s58 = sor.u32 %s56, %s57
      %p59 = scmp.eq.s32.totalorder %s58, 0
      %s61 = sadd.s32 %s60, 1
      %s62 = scalar_select %p59, %s60, %s61
      %p65 = pneg %p59
      %p66 = scmp.eq.s32.totalorder %s18, 3
      %p67 = por %p65, %p66
      %p68 = scmp.ne.s32.totalorder %s60, %s63
      %p69 = scmp.eq.s32.totalorder %s18, 0
      %p70 = por %p68, %p69
      %p71 = scmp.ne.s32.totalorder %s60, %s63
      %p72 = scmp.eq.s32.totalorder %s23, 3
      %p73 = por %p71, %p72
      %p74 = scmp.ne.s32.totalorder %s63, %s64
      %p75 = scmp.eq.s32.totalorder %s23, 0
      %p76 = por %p74, %p75
      %p77 = scmp.ne.s32.totalorder %s63, %s64
      %p78 = scmp.eq.s32.totalorder %s24, 3
      %p79 = por %p77, %p78
      %p81 = scmp.ne.s32.totalorder %s64, %s80
      %p82 = scmp.eq.s32.totalorder %s24, 0
      %p83 = por %p81, %p82
      %s84 = ssub.s32 %s25, %s51
      %s85 = ssub.s32 %s26, %s47
      %s86 = sor.u32 %s84, %s85
      %s87 = ssub.s32 %s28, %s39
      %s88 = sor.u32 %s86, %s87
      %s89 = ssub.s32 %s27, %s43
      %s90 = sor.u32 %s88, %s89
      %p91 = scmp.eq.s32.totalorder %s90, 0
      %s93 = sadd.s32 %s92, 1
      %s94 = scalar_select %p91, %s92, %s93
      %p97 = pneg %p91
      %p98 = scmp.eq.s32.totalorder %s18, 3
      %p99 = por %p97, %p98
      %p100 = scmp.ne.s32.totalorder %s92, %s95
      %p101 = scmp.eq.s32.totalorder %s18, 0
      %p102 = por %p100, %p101
      %p103 = scmp.ne.s32.totalorder %s92, %s95
      %p104 = scmp.eq.s32.totalorder %s23, 3
      %p105 = por %p103, %p104
      %p106 = scmp.ne.s32.totalorder %s95, %s96
      %p107 = scmp.eq.s32.totalorder %s23, 0
      %p108 = por %p106, %p107
      %p109 = scmp.ne.s32.totalorder %s95, %s96
      %p110 = scmp.eq.s32.totalorder %s24, 3
      %p111 = por %p109, %p110
      %p113 = scmp.ne.s32.totalorder %s96, %s112
      %p114 = scmp.eq.s32.totalorder %s24, 0
      %p115 = por %p113, %p114
      %s116 = ssub.s32 %s25, %s51
      %s117 = ssub.s32 %s26, %s47
      %s118 = sor.u32 %s116, %s117
      %s119 = ssub.s32 %s27, %s43
      %s120 = sor.u32 %s118, %s119
      %p121 = scmp.eq.s32.totalorder %s120, 0
      %s123 = sadd.s32 %s122, 1
      %s124 = scalar_select %p121, %s122, %s123
      %p127 = pneg %p121
      %p128 = scmp.eq.s32.totalorder %s18, 3
      %p129 = por %p127, %p128
      %p130 = scmp.ne.s32.totalorder %s122, %s125
      %p131 = scmp.eq.s32.totalorder %s18, 0
      %p132 = por %p130, %p131
      %p133 = scmp.ne.s32.totalorder %s122, %s125
      %p134 = scmp.eq.s32.totalorder %s23, 3
      %p135 = por %p133, %p134
      %p136 = scmp.ne.s32.totalorder %s125, %s126
      %p137 = scmp.eq.s32.totalorder %s23, 0
      %p138 = por %p136, %p137
      %p139 = scmp.ne.s32.totalorder %s125, %s126
      %p140 = scmp.eq.s32.totalorder %s24, 3
      %p141 = por %p139, %p140
      %p143 = scmp.ne.s32.totalorder %s126, %s142
      %p144 = scmp.eq.s32.totalorder %s24, 0
      %p145 = por %p143, %p144
      %s146 = ssub.s32 %s25, %s51
      %s147 = ssub.s32 %s26, %s47
      %s148 = sor.u32 %s146, %s147
      %s149 = ssub.s32 %s28, %s39
      %s150 = sor.u32 %s148, %s149
      %s151 = ssub.s32 %s27, %s43
      %s152 = sor.u32 %s150, %s151
      %p153 = scmp.eq.s32.totalorder %s152, 0
      %s155 = sadd.s32 %s154, 1
      %s156 = scalar_select %p153, %s154, %s155
      %p159 = pneg %p153
      %p160 = scmp.eq.s32.totalorder %s18, 3
      %p161 = por %p159, %p160
      %p162 = scmp.ne.s32.totalorder %s154, %s157
      %p163 = scmp.eq.s32.totalorder %s18, 0
      %p164 = por %p162, %p163
      %p165 = scmp.ne.s32.totalorder %s154, %s157
      %p166 = scmp.eq.s32.totalorder %s23, 3
      %p167 = por %p165, %p166
      %p168 = scmp.ne.s32.totalorder %s157, %s158
      %p169 = scmp.eq.s32.totalorder %s23, 0
      %p170 = por %p168, %p169
      %p171 = scmp.ne.s32.totalorder %s157, %s158
      %p172 = scmp.eq.s32.totalorder %s24, 3
      %p173 = por %p171, %p172
      %p175 = scmp.ne.s32.totalorder %s158, %s174
      %p176 = scmp.eq.s32.totalorder %s24, 0
      %p177 = por %p175, %p176
      %p178 = scmp.le.s32.totalorder 1, %s18
      %p179 = scmp.lt.s32.totalorder %s18, 5
      %p180 = pnand %p178, %p179
      %p181 = pneg %p180
      // Predicated region
      $region9: #{tpu_custom_call.1} parent=5 // pred_check
        _
      $region10: #{tpu_custom_call.1} parent=5 // pred_check_branch
        %183 = sbr.rel (%p180) target = $region12
      $region11: #{tpu_custom_call.1} parent=5 // pred_region
        %s184 = ssub.s32 %s18, 1
      $region12: #{tpu_custom_call.1} parent=5 // pred_fallthru
        _
      %p185 = scmp.lt.s32.totalorder %s18, 4
      // Predicated region
      $region13: #{tpu_custom_call.1} parent=5 // pred_check
        %p186 = pneg %p185
      $region14: #{tpu_custom_call.1} parent=5 // pred_check_branch
        %188 = sbr.rel (%p186) target = $region16
      $region15: #{tpu_custom_call.1} parent=5 // pred_region
        // Predicated region
        $region17: #{tpu_custom_call.1} parent=15 // pred_check
          %p189 = pneg %p70
        $region18: #{tpu_custom_call.1} parent=15 // pred_check_branch
          %191 = sbr.rel (%p189) target = $region20
        $region19: #{tpu_custom_call.1} parent=15 // pred_region
          %s192 = sand.u32 %s60, 1
          %s193 = scalar_lea.sflag [#allocation3], %s192
          %s194 = sand.u32 %s60, 1
          %s195 = smul.addr %s194, 64
          %s196 = scalar_lea.vmem [#allocation2], %s195
          %s197 = smul.u32 4, %s28
          %s198 = smul.u32 2, %s27
          %200 = vsyncadd %s193, 0
          %s201 = smul.addr %s197, 2
          %s202 = sadd.s32 %s198, %s201
          %s203 = smul.addr %s26, 8
          %s204 = sadd.s32 %s202, %s203
          %s205 = smul.addr %s25, 16
          %s206 = sadd.s32 %s204, %s205
          %s207 = smul.addr %s206, 8
          %s208 = scalar_lea.hbm %s0, %s207
          %s209 = sshll.u32 %s208, 4
          %s210 = int_to_ptr.hbm [resolvable:$true] %s209
          %s211 = sshll.u32 %s196, 4
          %s212 = int_to_ptr.vmem [resolvable:$true] %s211
          %217 = dma.hbm_to_vmem [thread:$0]  %s210, 1024, %s212, %s193, 128, 128, 8
        $region20: #{tpu_custom_call.1} parent=15 // pred_fallthru
          _
        // Predicated region
        $region21: #{tpu_custom_call.1} parent=15 // pred_check
          %p218 = pneg %p102
        $region22: #{tpu_custom_call.1} parent=15 // pred_check_branch
          %220 = sbr.rel (%p218) target = $region24
        $region23: #{tpu_custom_call.1} parent=15 // pred_region
          %s221 = sand.u32 %s18, 1
          %s222 = scalar_lea.sflag [#allocation6], %s221
          %s223 = sand.u32 %s92, 1
          %s224 = smul.addr %s223, 8
          %s225 = scalar_lea.vmem [#allocation5], %s224
          %s226 = smul.u32 4, %s28
          %228 = vsyncadd %s222, 0
          %s229 = sadd.s32 %s27, %s226
          %s230 = smul.addr %s26, 4
          %s231 = sadd.s32 %s229, %s230
          %s232 = smul.addr %s25, 8
          %s233 = sadd.s32 %s231, %s232
          %s234 = smul.addr %s233, 2
          %s235 = scalar_lea.hbm %s1, %s234
          %s236 = sshll.u32 %s235, 4
          %s237 = int_to_ptr.hbm [resolvable:$true] %s236
          %s238 = sshll.u32 %s225, 4
          %s239 = int_to_ptr.vmem [resolvable:$true] %s238
          %244 = dma.hbm_to_vmem [thread:$0]  %s237, 128, %s239, %s222, 32, 32, 2
        $region24: #{tpu_custom_call.1} parent=15 // pred_fallthru
          _
        // Predicated region
        $region25: #{tpu_custom_call.1} parent=15 // pred_check
          %p245 = pneg %p132
        $region26: #{tpu_custom_call.1} parent=15 // pred_check_branch
          %247 = sbr.rel (%p245) target = $region28
        $region27: #{tpu_custom_call.1} parent=15 // pred_region
          %s248 = sand.u32 %s18, 1
          %s249 = scalar_lea.sflag [#allocation6], %s248
          %s250 = sand.u32 %s122, 1
          %s251 = smul.addr %s250, 144
          %s252 = scalar_lea.vmem [#allocation7], %s251
          %s253 = smul.u32 2, %s27
          %255 = vsyncadd %s249, 0
          %s256 = smul.addr %s26, 18
          %s257 = sadd.s32 %s253, %s256
          %s258 = smul.addr %s25, 36
          %s259 = sadd.s32 %s257, %s258
          %s260 = smul.addr %s259, 8
          %s261 = scalar_lea.hbm %s2, %s260
          %s262 = sshll.u32 %s261, 4
          %s263 = int_to_ptr.hbm [resolvable:$true] %s262
          %s264 = sshll.u32 %s252, 4
          %s265 = int_to_ptr.vmem [resolvable:$true] %s264
          %270 = dma.hbm_to_vmem [thread:$0]  %s263, 2304, %s265, %s249, 128, 128, 8
        $region28: #{tpu_custom_call.1} parent=15 // pred_fallthru
          _
      $region16: #{tpu_custom_call.1} parent=5 // pred_fallthru
        _
      %p271 = scmp.le.s32.totalorder 1, %s18
      %p272 = scmp.lt.s32.totalorder %s18, 5
      %p273 = pnand %p271, %p272
      %p274 = pneg %p273
      // Predicated region
      $region29: #{tpu_custom_call.1} parent=5 // pred_check
        _
      $region30: #{tpu_custom_call.1} parent=5 // pred_check_branch
        %276 = sbr.rel (%p273) target = $region32
      $region31: #{tpu_custom_call.1} parent=5 // pred_region
        %s277 = ssub.s32 %s18, 1
        %s278 = sand.u32 %s63, 1
        %s279 = scalar_lea.sflag [#allocation3], %s278
        %s280 = sand.u32 %s63, 1
        %s281 = smul.addr %s280, 64
        %s282 = scalar_lea.vmem [#allocation2], %s281
        // Predicated region
        $region33: #{tpu_custom_call.1} parent=31 // pred_check
          %p283 = pneg %p76
        $region34: #{tpu_custom_call.1} parent=31 // pred_check_branch
          %285 = sbr.rel (%p283) target = $region36
        $region35: #{tpu_custom_call.1} parent=31 // pred_region
          %287 = dma.done %s279, 1024
        $region36: #{tpu_custom_call.1} parent=31 // pred_fallthru
          _
        %s288 = sand.u32 %s23, 1
        %s289 = scalar_lea.sflag [#allocation6], %s288
        %s290 = sand.u32 %s95, 1
        %s291 = smul.addr %s290, 8
        %s292 = scalar_lea.vmem [#allocation5], %s291
        // Predicated region
        $region37: #{tpu_custom_call.1} parent=31 // pred_check
          %p293 = pneg %p108
        $region38: #{tpu_custom_call.1} parent=31 // pred_check_branch
          %295 = sbr.rel (%p293) target = $region40
        $region39: #{tpu_custom_call.1} parent=31 // pred_region
          %297 = dma.done %s289, 128
        $region40: #{tpu_custom_call.1} parent=31 // pred_fallthru
          _
        %s298 = sand.u32 %s23, 1
        %s299 = scalar_lea.sflag [#allocation6], %s298
        %s300 = sand.u32 %s125, 1
        %s301 = smul.addr %s300, 144
        %s302 = scalar_lea.vmem [#allocation7], %s301
        // Predicated region
        $region41: #{tpu_custom_call.1} parent=31 // pred_check
          %p303 = pneg %p138
        $region42: #{tpu_custom_call.1} parent=31 // pred_check_branch
          %305 = sbr.rel (%p303) target = $region44
        $region43: #{tpu_custom_call.1} parent=31 // pred_region
          %307 = dma.done %s299, 2304
        $region44: #{tpu_custom_call.1} parent=31 // pred_fallthru
          _
        %s308 = sand.u32 %s63, 1
        %s309 = scalar_lea.sflag [#allocation3], %s308
        %s310 = sand.u32 %s63, 1
        %s311 = smul.addr %s310, 64
        %s312 = scalar_lea.vmem [#allocation2], %s311
        %p313 = pneg %p76
        %p314 = pneg %p73
        %s315 = sand.u32 %s23, 1
        %s316 = scalar_lea.sflag [#allocation6], %s315
        %s317 = sand.u32 %s95, 1
        %s318 = smul.addr %s317, 8
        %s319 = scalar_lea.vmem [#allocation5], %s318
        %p320 = pneg %p108
        %p321 = pneg %p105
        %s322 = sand.u32 %s23, 1
        %s323 = scalar_lea.sflag [#allocation6], %s322
        %s324 = sand.u32 %s125, 1
        %s325 = smul.addr %s324, 144
        %s326 = scalar_lea.vmem [#allocation7], %s325
        %p327 = pneg %p138
        %p328 = pneg %p135
        %p329 = pneg %p170
        %p330 = pneg %p167
        %s331 = sand.u32 %s157, 1
        %s332 = scalar_lea.sflag [#allocation4], %s331
        %s333 = sand.u32 %s157, 1
        %s334 = smul.addr %s333, 64
        %s335 = scalar_lea.vmem [#allocation8], %s334
        %s336 = smul.u32 4, %s32
        %s337 = smul.u32 2, %s31
        %s338 = smul.u32 4, %s32
        %s339 = smul.u32 2, %s31
        %s340 = smul.u32 4, %s32
        %s341 = smul.u32 2, %s31
        %v342 = vld [vmem:[%s282] sm:$0xff]
        %v343 = vld [vmem:[%s282 + $0x10] sm:$0xff]
        %v344 = vld [vmem:[%s282 + $0x20] sm:$0xff]
        %v345 = vld [vmem:[%s282 + $0x30] sm:$0xff]
        %v346 = vld [vmem:[%s302] sm:$0xff]
        %v347 = vmul.f32 %v342, %v346
        %v348 = vmul.f32 %v343, %v346
        %v349 = vmul.f32 %v344, %v346
        %v350 = vmul.f32 %v345, %v346
        %v351 = vadd.f32 %v347, 0.0
        %v352 = vadd.f32 %v348, 0.0
        %v353 = vadd.f32 %v349, 0.0
        %v354 = vadd.f32 %v350, 0.0
        %356 = vrot.lane.b32.xlu0 %v346, 96
        %v357 = vpop.permute.xlu0 %356
        %v359 = vmul.f32 %v342, %v357
        %v360 = vmul.f32 %v343, %v357
        %v361 = vmul.f32 %v344, %v357
        %v362 = vmul.f32 %v345, %v357
        %v363 = vadd.f32 %v359, 0.0
        %v364 = vadd.f32 %v360, 0.0
        %v365 = vadd.f32 %v361, 0.0
        %v366 = vadd.f32 %v362, 0.0
        %s367 = scalar_lea.vmem %s302, 16 [#allocation7]
        %v368 = vld [vmem:[%s367] sm:$0xff]
        %370 = vrot.lane.b32.xlu0 %v368, 2
        %v371 = vpop.permute.xlu0 %370
        %v373 = vmul.f32 %v342, %v371
        %v374 = vmul.f32 %v343, %v371
        %v375 = vmul.f32 %v344, %v371
        %v376 = vmul.f32 %v345, %v371
        %381 = vrot.lane.b32.xlu0 %v373, 126
        %v382 = vpop.permute.xlu0 %381
        %383 = vrot.lane.b32.xlu0 %v374, 126
        %v384 = vpop.permute.xlu0 %383
        %385 = vrot.lane.b32.xlu0 %v375, 126
        %v386 = vpop.permute.xlu0 %385
        %387 = vrot.lane.b32.xlu0 %v376, 126
        %v388 = vpop.permute.xlu0 %387
        %v393 = vadd.f32 %v351, %v382
        %v394 = vadd.f32 %v352, %v384
        %v395 = vadd.f32 %v353, %v386
        %v396 = vadd.f32 %v354, %v388
        %397 = vrot.lane.b32.xlu0 %v368, 98
        %v398 = vpop.permute.xlu0 %397
        %v400 = vmul.f32 %v342, %v398
        %v401 = vmul.f32 %v343, %v398
        %v402 = vmul.f32 %v344, %v398
        %v403 = vmul.f32 %v345, %v398
        %408 = vrot.lane.b32.xlu0 %v400, 126
        %v409 = vpop.permute.xlu0 %408
        %410 = vrot.lane.b32.xlu0 %v401, 126
        %v411 = vpop.permute.xlu0 %410
        %412 = vrot.lane.b32.xlu0 %v402, 126
        %v413 = vpop.permute.xlu0 %412
        %414 = vrot.lane.b32.xlu0 %v403, 126
        %v415 = vpop.permute.xlu0 %414
        %v420 = vadd.f32 %v363, %v409
        %v421 = vadd.f32 %v364, %v411
        %v422 = vadd.f32 %v365, %v413
        %v423 = vadd.f32 %v366, %v415
        %s424 = scalar_lea.vmem %s302, 32 [#allocation7]
        %v425 = vld [vmem:[%s424] sm:$0xff]
        %427 = vrot.lane.b32.xlu0 %v425, 4
        %v428 = vpop.permute.xlu0 %427
        %v430 = vmul.f32 %v342, %v428
        %v431 = vmul.f32 %v343, %v428
        %v432 = vmul.f32 %v344, %v428
        %v433 = vmul.f32 %v345, %v428
        %438 = vrot.lane.b32.xlu0 %v430, 124
        %v439 = vpop.permute.xlu0 %438
        %440 = vrot.lane.b32.xlu0 %v431, 124
        %v441 = vpop.permute.xlu0 %440
        %442 = vrot.lane.b32.xlu0 %v432, 124
        %v443 = vpop.permute.xlu0 %442
        %444 = vrot.lane.b32.xlu0 %v433, 124
        %v445 = vpop.permute.xlu0 %444
        %v450 = vadd.f32 %v393, %v439
        %v451 = vadd.f32 %v394, %v441
        %v452 = vadd.f32 %v395, %v443
        %v453 = vadd.f32 %v396, %v445
        %454 = vrot.lane.b32.xlu0 %v425, 100
        %v455 = vpop.permute.xlu0 %454
        %v457 = vmul.f32 %v342, %v455
        %v458 = vmul.f32 %v343, %v455
        %v459 = vmul.f32 %v344, %v455
        %v460 = vmul.f32 %v345, %v455
        %465 = vrot.lane.b32.xlu0 %v457, 124
        %v466 = vpop.permute.xlu0 %465
        %467 = vrot.lane.b32.xlu0 %v458, 124
        %v468 = vpop.permute.xlu0 %467
        %469 = vrot.lane.b32.xlu0 %v459, 124
        %v470 = vpop.permute.xlu0 %469
        %471 = vrot.lane.b32.xlu0 %v460, 124
        %v472 = vpop.permute.xlu0 %471
        %v477 = vadd.f32 %v420, %v466
        %v478 = vadd.f32 %v421, %v468
        %v479 = vadd.f32 %v422, %v470
        %v480 = vadd.f32 %v423, %v472
        %v481 = vld [vmem:[%s282 + $0x1] sm:$0xff]
        %v482 = vld [vmem:[%s282 + $0x11] sm:$0xff]
        %v483 = vld [vmem:[%s282 + $0x21] sm:$0xff]
        %v484 = vld [vmem:[%s282 + $0x31] sm:$0xff]
        %s485 = scalar_lea.vmem %s302, 48 [#allocation7]
        %v486 = vld [vmem:[%s485] sm:$0xff]
        %v487 = vmul.f32 %v481, %v486
        %v488 = vmul.f32 %v482, %v486
        %v489 = vmul.f32 %v483, %v486
        %v490 = vmul.f32 %v484, %v486
        %v491 = vadd.f32 %v450, %v487
        %v492 = vadd.f32 %v451, %v488
        %v493 = vadd.f32 %v452, %v489
        %v494 = vadd.f32 %v453, %v490
        %496 = vrot.lane.b32.xlu0 %v486, 96
        %v497 = vpop.permute.xlu0 %496
        %v499 = vmul.f32 %v481, %v497
        %v500 = vmul.f32 %v482, %v497
        %v501 = vmul.f32 %v483, %v497
        %v502 = vmul.f32 %v484, %v497
        %v503 = vadd.f32 %v477, %v499
        %v504 = vadd.f32 %v478, %v500
        %v505 = vadd.f32 %v479, %v501
        %v506 = vadd.f32 %v480, %v502
        %s507 = scalar_lea.vmem %s302, 64 [#allocation7]
        %v508 = vld [vmem:[%s507] sm:$0xff]
        %510 = vrot.lane.b32.xlu0 %v508, 2
        %v511 = vpop.permute.xlu0 %510
        %v513 = vmul.f32 %v481, %v511
        %v514 = vmul.f32 %v482, %v511
        %v515 = vmul.f32 %v483, %v511
        %v516 = vmul.f32 %v484, %v511
        %521 = vrot.lane.b32.xlu0 %v513, 126
        %v522 = vpop.permute.xlu0 %521
        %523 = vrot.lane.b32.xlu0 %v514, 126
        %v524 = vpop.permute.xlu0 %523
        %525 = vrot.lane.b32.xlu0 %v515, 126
        %v526 = vpop.permute.xlu0 %525
        %527 = vrot.lane.b32.xlu0 %v516, 126
        %v528 = vpop.permute.xlu0 %527
        %v533 = vadd.f32 %v491, %v522
        %v534 = vadd.f32 %v492, %v524
        %v535 = vadd.f32 %v493, %v526
        %v536 = vadd.f32 %v494, %v528
        %537 = vrot.lane.b32.xlu0 %v508, 98
        %v538 = vpop.permute.xlu0 %537
        %v540 = vmul.f32 %v481, %v538
        %v541 = vmul.f32 %v482, %v538
        %v542 = vmul.f32 %v483, %v538
        %v543 = vmul.f32 %v484, %v538
        %548 = vrot.lane.b32.xlu0 %v540, 126
        %v549 = vpop.permute.xlu0 %548
        %550 = vrot.lane.b32.xlu0 %v541, 126
        %v551 = vpop.permute.xlu0 %550
        %552 = vrot.lane.b32.xlu0 %v542, 126
        %v553 = vpop.permute.xlu0 %552
        %554 = vrot.lane.b32.xlu0 %v543, 126
        %v555 = vpop.permute.xlu0 %554
        %v560 = vadd.f32 %v503, %v549
        %v561 = vadd.f32 %v504, %v551
        %v562 = vadd.f32 %v505, %v553
        %v563 = vadd.f32 %v506, %v555
        %s564 = scalar_lea.vmem %s302, 80 [#allocation7]
        %v565 = vld [vmem:[%s564] sm:$0xff]
        %567 = vrot.lane.b32.xlu0 %v565, 4
        %v568 = vpop.permute.xlu0 %567
        %v570 = vmul.f32 %v481, %v568
        %v571 = vmul.f32 %v482, %v568
        %v572 = vmul.f32 %v483, %v568
        %v573 = vmul.f32 %v484, %v568
        %578 = vrot.lane.b32.xlu0 %v570, 124
        %v579 = vpop.permute.xlu0 %578
        %580 = vrot.lane.b32.xlu0 %v571, 124
        %v581 = vpop.permute.xlu0 %580
        %582 = vrot.lane.b32.xlu0 %v572, 124
        %v583 = vpop.permute.xlu0 %582
        %584 = vrot.lane.b32.xlu0 %v573, 124
        %v585 = vpop.permute.xlu0 %584
        %v590 = vadd.f32 %v533, %v579
        %v591 = vadd.f32 %v534, %v581
        %v592 = vadd.f32 %v535, %v583
        %v593 = vadd.f32 %v536, %v585
        %594 = vrot.lane.b32.xlu0 %v565, 100
        %v595 = vpop.permute.xlu0 %594
        %v597 = vmul.f32 %v481, %v595
        %v598 = vmul.f32 %v482, %v595
        %v599 = vmul.f32 %v483, %v595
        %v600 = vmul.f32 %v484, %v595
        %605 = vrot.lane.b32.xlu0 %v597, 124
        %v606 = vpop.permute.xlu0 %605
        %607 = vrot.lane.b32.xlu0 %v598, 124
        %v608 = vpop.permute.xlu0 %607
        %609 = vrot.lane.b32.xlu0 %v599, 124
        %v610 = vpop.permute.xlu0 %609
        %611 = vrot.lane.b32.xlu0 %v600, 124
        %v612 = vpop.permute.xlu0 %611
        %v617 = vadd.f32 %v560, %v606
        %v618 = vadd.f32 %v561, %v608
        %v619 = vadd.f32 %v562, %v610
        %v620 = vadd.f32 %v563, %v612
        %v621 = vld [vmem:[%s282 + $0x2] sm:$0xff]
        %v622 = vld [vmem:[%s282 + $0x12] sm:$0xff]
        %v623 = vld [vmem:[%s282 + $0x22] sm:$0xff]
        %v624 = vld [vmem:[%s282 + $0x32] sm:$0xff]
        %s625 = scalar_lea.vmem %s302, 96 [#allocation7]
        %v626 = vld [vmem:[%s625] sm:$0xff]
        %v627 = vmul.f32 %v621, %v626
        %v628 = vmul.f32 %v622, %v626
        %v629 = vmul.f32 %v623, %v626
        %v630 = vmul.f32 %v624, %v626
        %v631 = vadd.f32 %v590, %v627
        %v632 = vadd.f32 %v591, %v628
        %v633 = vadd.f32 %v592, %v629
        %v634 = vadd.f32 %v593, %v630
        %636 = vrot.lane.b32.xlu0 %v626, 96
        %v637 = vpop.permute.xlu0 %636
        %v639 = vmul.f32 %v621, %v637
        %v640 = vmul.f32 %v622, %v637
        %v641 = vmul.f32 %v623, %v637
        %v642 = vmul.f32 %v624, %v637
        %v643 = vadd.f32 %v617, %v639
        %v644 = vadd.f32 %v618, %v640
        %v645 = vadd.f32 %v619, %v641
        %v646 = vadd.f32 %v620, %v642
        %s647 = scalar_lea.vmem %s302, 112 [#allocation7]
        %v648 = vld [vmem:[%s647] sm:$0xff]
        %650 = vrot.lane.b32.xlu0 %v648, 2
        %v651 = vpop.permute.xlu0 %650
        %v653 = vmul.f32 %v621, %v651
        %v654 = vmul.f32 %v622, %v651
        %v655 = vmul.f32 %v623, %v651
        %v656 = vmul.f32 %v624, %v651
        %661 = vrot.lane.b32.xlu0 %v653, 126
        %v662 = vpop.permute.xlu0 %661
        %663 = vrot.lane.b32.xlu0 %v654, 126
        %v664 = vpop.permute.xlu0 %663
        %665 = vrot.lane.b32.xlu0 %v655, 126
        %v666 = vpop.permute.xlu0 %665
        %667 = vrot.lane.b32.xlu0 %v656, 126
        %v668 = vpop.permute.xlu0 %667
        %v673 = vadd.f32 %v631, %v662
        %v674 = vadd.f32 %v632, %v664
        %v675 = vadd.f32 %v633, %v666
        %v676 = vadd.f32 %v634, %v668
        %677 = vrot.lane.b32.xlu0 %v648, 98
        %v678 = vpop.permute.xlu0 %677
        %v680 = vmul.f32 %v621, %v678
        %v681 = vmul.f32 %v622, %v678
        %v682 = vmul.f32 %v623, %v678
        %v683 = vmul.f32 %v624, %v678
        %688 = vrot.lane.b32.xlu0 %v680, 126
        %v689 = vpop.permute.xlu0 %688
        %690 = vrot.lane.b32.xlu0 %v681, 126
        %v691 = vpop.permute.xlu0 %690
        %692 = vrot.lane.b32.xlu0 %v682, 126
        %v693 = vpop.permute.xlu0 %692
        %694 = vrot.lane.b32.xlu0 %v683, 126
        %v695 = vpop.permute.xlu0 %694
        %v700 = vadd.f32 %v643, %v689
        %v701 = vadd.f32 %v644, %v691
        %v702 = vadd.f32 %v645, %v693
        %v703 = vadd.f32 %v646, %v695
        %s704 = scalar_lea.vmem %s302, 128 [#allocation7]
        %v705 = vld [vmem:[%s704] sm:$0xff]
        %707 = vrot.lane.b32.xlu0 %v705, 4
        %v708 = vpop.permute.xlu0 %707
        %v710 = vmul.f32 %v621, %v708
        %v711 = vmul.f32 %v622, %v708
        %v712 = vmul.f32 %v623, %v708
        %v713 = vmul.f32 %v624, %v708
        %718 = vrot.lane.b32.xlu0 %v710, 124
        %v719 = vpop.permute.xlu0 %718
        %720 = vrot.lane.b32.xlu0 %v711, 124
        %v721 = vpop.permute.xlu0 %720
        %722 = vrot.lane.b32.xlu0 %v712, 124
        %v723 = vpop.permute.xlu0 %722
        %724 = vrot.lane.b32.xlu0 %v713, 124
        %v725 = vpop.permute.xlu0 %724
        %v730 = vadd.f32 %v673, %v719
        %v731 = vadd.f32 %v674, %v721
        %v732 = vadd.f32 %v675, %v723
        %v733 = vadd.f32 %v676, %v725
        %734 = vrot.lane.b32.xlu0 %v705, 100
        %v735 = vpop.permute.xlu0 %734
        %v737 = vmul.f32 %v621, %v735
        %v738 = vmul.f32 %v622, %v735
        %v739 = vmul.f32 %v623, %v735
        %v740 = vmul.f32 %v624, %v735
        %745 = vrot.lane.b32.xlu0 %v737, 124
        %v746 = vpop.permute.xlu0 %745
        %747 = vrot.lane.b32.xlu0 %v738, 124
        %v748 = vpop.permute.xlu0 %747
        %749 = vrot.lane.b32.xlu0 %v739, 124
        %v750 = vpop.permute.xlu0 %749
        %751 = vrot.lane.b32.xlu0 %v740, 124
        %v752 = vpop.permute.xlu0 %751
        %v757 = vadd.f32 %v700, %v746
        %v758 = vadd.f32 %v701, %v748
        %v759 = vadd.f32 %v702, %v750
        %v760 = vadd.f32 %v703, %v752
        %765 = vrot.lane.b32.xlu0 %v757, 32
        %v766 = vpop.permute.xlu0 %765
        %767 = vrot.lane.b32.xlu0 %v758, 32
        %v768 = vpop.permute.xlu0 %767
        %769 = vrot.lane.b32.xlu0 %v759, 32
        %v770 = vpop.permute.xlu0 %769
        %771 = vrot.lane.b32.xlu0 %v760, 32
        %v772 = vpop.permute.xlu0 %771
        %vm777 = vcmask 261120
        %v778 = vsel %vm777, %v730, %v766
        %v779 = vsel %vm777, %v731, %v768
        %v780 = vsel %vm777, %v732, %v770
        %v781 = vsel %vm777, %v733, %v772
        %vm782 = vcmask 523264
        %783 = vst.msk [vmem:[%s335] sm:$0xff] %vm782, %v778
        %784 = vst.msk [vmem:[%s335 + $0x10] sm:$0xff] %vm782, %v779
        %785 = vst.msk [vmem:[%s335 + $0x20] sm:$0xff] %vm782, %v780
        %786 = vst.msk [vmem:[%s335 + $0x30] sm:$0xff] %vm782, %v781
        %v787 = vld [vmem:[%s282 + $0x8] sm:$0xff]
        %v788 = vld [vmem:[%s282 + $0x18] sm:$0xff]
        %v789 = vld [vmem:[%s282 + $0x28] sm:$0xff]
        %v790 = vld [vmem:[%s282 + $0x38] sm:$0xff]
        %v791 = vld [vmem:[%s302 + $0x8] sm:$0xff]
        %v792 = vmul.f32 %v787, %v791
        %v793 = vmul.f32 %v788, %v791
        %v794 = vmul.f32 %v789, %v791
        %v795 = vmul.f32 %v790, %v791
        %v796 = vadd.f32 %v792, 0.0
        %v797 = vadd.f32 %v793, 0.0
        %v798 = vadd.f32 %v794, 0.0
        %v799 = vadd.f32 %v795, 0.0
        %801 = vrot.lane.b32.xlu0 %v791, 96
        %v802 = vpop.permute.xlu0 %801
        %v804 = vmul.f32 %v787, %v802
        %v805 = vmul.f32 %v788, %v802
        %v806 = vmul.f32 %v789, %v802
        %v807 = vmul.f32 %v790, %v802
        %v808 = vadd.f32 %v804, 0.0
        %v809 = vadd.f32 %v805, 0.0
        %v810 = vadd.f32 %v806, 0.0
        %v811 = vadd.f32 %v807, 0.0
        %v812 = vld [vmem:[%s367 + $0x8] sm:$0xff]
        %814 = vrot.lane.b32.xlu0 %v812, 2
        %v815 = vpop.permute.xlu0 %814
        %v817 = vmul.f32 %v787, %v815
        %v818 = vmul.f32 %v788, %v815
        %v819 = vmul.f32 %v789, %v815
        %v820 = vmul.f32 %v790, %v815
        %825 = vrot.lane.b32.xlu0 %v817, 126
        %v826 = vpop.permute.xlu0 %825
        %827 = vrot.lane.b32.xlu0 %v818, 126
        %v828 = vpop.permute.xlu0 %827
        %829 = vrot.lane.b32.xlu0 %v819, 126
        %v830 = vpop.permute.xlu0 %829
        %831 = vrot.lane.b32.xlu0 %v820, 126
        %v832 = vpop.permute.xlu0 %831
        %v837 = vadd.f32 %v796, %v826
        %v838 = vadd.f32 %v797, %v828
        %v839 = vadd.f32 %v798, %v830
        %v840 = vadd.f32 %v799, %v832
        %841 = vrot.lane.b32.xlu0 %v812, 98
        %v842 = vpop.permute.xlu0 %841
        %v844 = vmul.f32 %v787, %v842
        %v845 = vmul.f32 %v788, %v842
        %v846 = vmul.f32 %v789, %v842
        %v847 = vmul.f32 %v790, %v842
        %852 = vrot.lane.b32.xlu0 %v844, 126
        %v853 = vpop.permute.xlu0 %852
        %854 = vrot.lane.b32.xlu0 %v845, 126
        %v855 = vpop.permute.xlu0 %854
        %856 = vrot.lane.b32.xlu0 %v846, 126
        %v857 = vpop.permute.xlu0 %856
        %858 = vrot.lane.b32.xlu0 %v847, 126
        %v859 = vpop.permute.xlu0 %858
        %v864 = vadd.f32 %v808, %v853
        %v865 = vadd.f32 %v809, %v855
        %v866 = vadd.f32 %v810, %v857
        %v867 = vadd.f32 %v811, %v859
        %v868 = vld [vmem:[%s424 + $0x8] sm:$0xff]
        %870 = vrot.lane.b32.xlu0 %v868, 4
        %v871 = vpop.permute.xlu0 %870
        %v873 = vmul.f32 %v787, %v871
        %v874 = vmul.f32 %v788, %v871
        %v875 = vmul.f32 %v789, %v871
        %v876 = vmul.f32 %v790, %v871
        %881 = vrot.lane.b32.xlu0 %v873, 124
        %v882 = vpop.permute.xlu0 %881
        %883 = vrot.lane.b32.xlu0 %v874, 124
        %v884 = vpop.permute.xlu0 %883
        %885 = vrot.lane.b32.xlu0 %v875, 124
        %v886 = vpop.permute.xlu0 %885
        %887 = vrot.lane.b32.xlu0 %v876, 124
        %v888 = vpop.permute.xlu0 %887
        %v893 = vadd.f32 %v837, %v882
        %v894 = vadd.f32 %v838, %v884
        %v895 = vadd.f32 %v839, %v886
        %v896 = vadd.f32 %v840, %v888
        %897 = vrot.lane.b32.xlu0 %v868, 100
        %v898 = vpop.permute.xlu0 %897
        %v900 = vmul.f32 %v787, %v898
        %v901 = vmul.f32 %v788, %v898
        %v902 = vmul.f32 %v789, %v898
        %v903 = vmul.f32 %v790, %v898
        %908 = vrot.lane.b32.xlu0 %v900, 124
        %v909 = vpop.permute.xlu0 %908
        %910 = vrot.lane.b32.xlu0 %v901, 124
        %v911 = vpop.permute.xlu0 %910
        %912 = vrot.lane.b32.xlu0 %v902, 124
        %v913 = vpop.permute.xlu0 %912
        %914 = vrot.lane.b32.xlu0 %v903, 124
        %v915 = vpop.permute.xlu0 %914
        %v920 = vadd.f32 %v864, %v909
        %v921 = vadd.f32 %v865, %v911
        %v922 = vadd.f32 %v866, %v913
        %v923 = vadd.f32 %v867, %v915
        %v924 = vld [vmem:[%s282 + $0x9] sm:$0x7f]
        %v925 = vld [vmem:[%s282 + $0x19] sm:$0x7f]
        %v926 = vld [vmem:[%s282 + $0x29] sm:$0x7f]
        %v927 = vld [vmem:[%s282 + $0x39] sm:$0x7f]
        %v928 = vld [vmem:[%s292] sm:$0x1]
        %v929 = vld [vmem:[%s292 + $0x2] sm:$0x1]
        %v930 = vld [vmem:[%s292 + $0x4] sm:$0x1]
        %v931 = vld [vmem:[%s292 + $0x6] sm:$0x1]
        %v936 = vrot.slane %v928, 1
        %v937 = vrot.slane %v929, 1
        %v938 = vrot.slane %v930, 1
        %v939 = vrot.slane %v931, 1
        %vm944 = vcmask 1046528
        %v945 = vsel %vm944, %v924, %v936
        %v946 = vsel %vm944, %v925, %v937
        %v947 = vsel %vm944, %v926, %v938
        %v948 = vsel %vm944, %v927, %v939
        %v949 = vld [vmem:[%s485 + $0x8] sm:$0xff]
        %v950 = vmul.f32 %v945, %v949
        %v951 = vmul.f32 %v946, %v949
        %v952 = vmul.f32 %v947, %v949
        %v953 = vmul.f32 %v948, %v949
        %v954 = vadd.f32 %v893, %v950
        %v955 = vadd.f32 %v894, %v951
        %v956 = vadd.f32 %v895, %v952
        %v957 = vadd.f32 %v896, %v953
        %959 = vrot.lane.b32.xlu0 %v949, 96
        %v960 = vpop.permute.xlu0 %959
        %v962 = vmul.f32 %v945, %v960
        %v963 = vmul.f32 %v946, %v960
        %v964 = vmul.f32 %v947, %v960
        %v965 = vmul.f32 %v948, %v960
        %v966 = vadd.f32 %v920, %v962
        %v967 = vadd.f32 %v921, %v963
        %v968 = vadd.f32 %v922, %v964
        %v969 = vadd.f32 %v923, %v965
        %v970 = vld [vmem:[%s507 + $0x8] sm:$0xff]
        %972 = vrot.lane.b32.xlu0 %v970, 2
        %v973 = vpop.permute.xlu0 %972
        %v975 = vmul.f32 %v945, %v973
        %v976 = vmul.f32 %v946, %v973
        %v977 = vmul.f32 %v947, %v973
        %v978 = vmul.f32 %v948, %v973
        %983 = vrot.lane.b32.xlu0 %v975, 126
        %v984 = vpop.permute.xlu0 %983
        %985 = vrot.lane.b32.xlu0 %v976, 126
        %v986 = vpop.permute.xlu0 %985
        %987 = vrot.lane.b32.xlu0 %v977, 126
        %v988 = vpop.permute.xlu0 %987
        %989 = vrot.lane.b32.xlu0 %v978, 126
        %v990 = vpop.permute.xlu0 %989
        %v995 = vadd.f32 %v954, %v984
        %v996 = vadd.f32 %v955, %v986
        %v997 = vadd.f32 %v956, %v988
        %v998 = vadd.f32 %v957, %v990
        %999 = vrot.lane.b32.xlu0 %v970, 98
        %v1000 = vpop.permute.xlu0 %999
        %v1002 = vmul.f32 %v945, %v1000
        %v1003 = vmul.f32 %v946, %v1000
        %v1004 = vmul.f32 %v947, %v1000
        %v1005 = vmul.f32 %v948, %v1000
        %1010 = vrot.lane.b32.xlu0 %v1002, 126
        %v1011 = vpop.permute.xlu0 %1010
        %1012 = vrot.lane.b32.xlu0 %v1003, 126
        %v1013 = vpop.permute.xlu0 %1012
        %1014 = vrot.lane.b32.xlu0 %v1004, 126
        %v1015 = vpop.permute.xlu0 %1014
        %1016 = vrot.lane.b32.xlu0 %v1005, 126
        %v1017 = vpop.permute.xlu0 %1016
        %v1022 = vadd.f32 %v966, %v1011
        %v1023 = vadd.f32 %v967, %v1013
        %v1024 = vadd.f32 %v968, %v1015
        %v1025 = vadd.f32 %v969, %v1017
        %v1026 = vld [vmem:[%s564 + $0x8] sm:$0xff]
        %1028 = vrot.lane.b32.xlu0 %v1026, 4
        %v1029 = vpop.permute.xlu0 %1028
        %v1031 = vmul.f32 %v945, %v1029
        %v1032 = vmul.f32 %v946, %v1029
        %v1033 = vmul.f32 %v947, %v1029
        %v1034 = vmul.f32 %v948, %v1029
        %1039 = vrot.lane.b32.xlu0 %v1031, 124
        %v1040 = vpop.permute.xlu0 %1039
        %1041 = vrot.lane.b32.xlu0 %v1032, 124
        %v1042 = vpop.permute.xlu0 %1041
        %1043 = vrot.lane.b32.xlu0 %v1033, 124
        %v1044 = vpop.permute.xlu0 %1043
        %1045 = vrot.lane.b32.xlu0 %v1034, 124
        %v1046 = vpop.permute.xlu0 %1045
        %v1051 = vadd.f32 %v995, %v1040
        %v1052 = vadd.f32 %v996, %v1042
        %v1053 = vadd.f32 %v997, %v1044
        %v1054 = vadd.f32 %v998, %v1046
        %1055 = vrot.lane.b32.xlu0 %v1026, 100
        %v1056 = vpop.permute.xlu0 %1055
        %v1058 = vmul.f32 %v945, %v1056
        %v1059 = vmul.f32 %v946, %v1056
        %v1060 = vmul.f32 %v947, %v1056
        %v1061 = vmul.f32 %v948, %v1056
        %1066 = vrot.lane.b32.xlu0 %v1058, 124
        %v1067 = vpop.permute.xlu0 %1066
        %1068 = vrot.lane.b32.xlu0 %v1059, 124
        %v1069 = vpop.permute.xlu0 %1068
        %1070 = vrot.lane.b32.xlu0 %v1060, 124
        %v1071 = vpop.permute.xlu0 %1070
        %1072 = vrot.lane.b32.xlu0 %v1061, 124
        %v1073 = vpop.permute.xlu0 %1072
        %v1078 = vadd.f32 %v1022, %v1067
        %v1079 = vadd.f32 %v1023, %v1069
        %v1080 = vadd.f32 %v1024, %v1071
        %v1081 = vadd.f32 %v1025, %v1073
        %v1082 = vld [vmem:[%s282 + $0xa] sm:$0x3f]
        %v1083 = vld [vmem:[%s282 + $0x1a] sm:$0x3f]
        %v1084 = vld [vmem:[%s282 + $0x2a] sm:$0x3f]
        %v1085 = vld [vmem:[%s282 + $0x3a] sm:$0x3f]
        %v1086 = vld [vmem:[%s292] sm:$0x3]
        %v1087 = vld [vmem:[%s292 + $0x2] sm:$0x3]
        %v1088 = vld [vmem:[%s292 + $0x4] sm:$0x3]
        %v1089 = vld [vmem:[%s292 + $0x6] sm:$0x3]
        %v1094 = vrot.slane %v1086, 2
        %v1095 = vrot.slane %v1087, 2
        %v1096 = vrot.slane %v1088, 2
        %v1097 = vrot.slane %v1089, 2
        %vm1102 = vcmask 1045504
        %v1103 = vsel %vm1102, %v1082, %v1094
        %v1104 = vsel %vm1102, %v1083, %v1095
        %v1105 = vsel %vm1102, %v1084, %v1096
        %v1106 = vsel %vm1102, %v1085, %v1097
        %v1107 = vld [vmem:[%s625 + $0x8] sm:$0xff]
        %v1108 = vmul.f32 %v1103, %v1107
        %v1109 = vmul.f32 %v1104, %v1107
        %v1110 = vmul.f32 %v1105, %v1107
        %v1111 = vmul.f32 %v1106, %v1107
        %v1112 = vadd.f32 %v1051, %v1108
        %v1113 = vadd.f32 %v1052, %v1109
        %v1114 = vadd.f32 %v1053, %v1110
        %v1115 = vadd.f32 %v1054, %v1111
        %1117 = vrot.lane.b32.xlu0 %v1107, 96
        %v1118 = vpop.permute.xlu0 %1117
        %v1120 = vmul.f32 %v1103, %v1118
        %v1121 = vmul.f32 %v1104, %v1118
        %v1122 = vmul.f32 %v1105, %v1118
        %v1123 = vmul.f32 %v1106, %v1118
        %v1124 = vadd.f32 %v1078, %v1120
        %v1125 = vadd.f32 %v1079, %v1121
        %v1126 = vadd.f32 %v1080, %v1122
        %v1127 = vadd.f32 %v1081, %v1123
        %v1128 = vld [vmem:[%s647 + $0x8] sm:$0xff]
        %1130 = vrot.lane.b32.xlu0 %v1128, 2
        %v1131 = vpop.permute.xlu0 %1130
        %v1133 = vmul.f32 %v1103, %v1131
        %v1134 = vmul.f32 %v1104, %v1131
        %v1135 = vmul.f32 %v1105, %v1131
        %v1136 = vmul.f32 %v1106, %v1131
        %1141 = vrot.lane.b32.xlu0 %v1133, 126
        %v1142 = vpop.permute.xlu0 %1141
        %1143 = vrot.lane.b32.xlu0 %v1134, 126
        %v1144 = vpop.permute.xlu0 %1143
        %1145 = vrot.lane.b32.xlu0 %v1135, 126
        %v1146 = vpop.permute.xlu0 %1145
        %1147 = vrot.lane.b32.xlu0 %v1136, 126
        %v1148 = vpop.permute.xlu0 %1147
        %v1153 = vadd.f32 %v1112, %v1142
        %v1154 = vadd.f32 %v1113, %v1144
        %v1155 = vadd.f32 %v1114, %v1146
        %v1156 = vadd.f32 %v1115, %v1148
        %1157 = vrot.lane.b32.xlu0 %v1128, 98
        %v1158 = vpop.permute.xlu0 %1157
        %v1160 = vmul.f32 %v1103, %v1158
        %v1161 = vmul.f32 %v1104, %v1158
        %v1162 = vmul.f32 %v1105, %v1158
        %v1163 = vmul.f32 %v1106, %v1158
        %1168 = vrot.lane.b32.xlu0 %v1160, 126
        %v1169 = vpop.permute.xlu0 %1168
        %1170 = vrot.lane.b32.xlu0 %v1161, 126
        %v1171 = vpop.permute.xlu0 %1170
        %1172 = vrot.lane.b32.xlu0 %v1162, 126
        %v1173 = vpop.permute.xlu0 %1172
        %1174 = vrot.lane.b32.xlu0 %v1163, 126
        %v1175 = vpop.permute.xlu0 %1174
        %v1180 = vadd.f32 %v1124, %v1169
        %v1181 = vadd.f32 %v1125, %v1171
        %v1182 = vadd.f32 %v1126, %v1173
        %v1183 = vadd.f32 %v1127, %v1175
        %v1184 = vld [vmem:[%s704 + $0x8] sm:$0xff]
        %1186 = vrot.lane.b32.xlu0 %v1184, 4
        %v1187 = vpop.permute.xlu0 %1186
        %v1189 = vmul.f32 %v1103, %v1187
        %v1190 = vmul.f32 %v1104, %v1187
        %v1191 = vmul.f32 %v1105, %v1187
        %v1192 = vmul.f32 %v1106, %v1187
        %1197 = vrot.lane.b32.xlu0 %v1189, 124
        %v1198 = vpop.permute.xlu0 %1197
        %1199 = vrot.lane.b32.xlu0 %v1190, 124
        %v1200 = vpop.permute.xlu0 %1199
        %1201 = vrot.lane.b32.xlu0 %v1191, 124
        %v1202 = vpop.permute.xlu0 %1201
        %1203 = vrot.lane.b32.xlu0 %v1192, 124
        %v1204 = vpop.permute.xlu0 %1203
        %v1209 = vadd.f32 %v1153, %v1198
        %v1210 = vadd.f32 %v1154, %v1200
        %v1211 = vadd.f32 %v1155, %v1202
        %v1212 = vadd.f32 %v1156, %v1204
        %1213 = vrot.lane.b32.xlu0 %v1184, 100
        %v1214 = vpop.permute.xlu0 %1213
        %v1216 = vmul.f32 %v1103, %v1214
        %v1217 = vmul.f32 %v1104, %v1214
        %v1218 = vmul.f32 %v1105, %v1214
        %v1219 = vmul.f32 %v1106, %v1214
        %1224 = vrot.lane.b32.xlu0 %v1216, 124
        %v1225 = vpop.permute.xlu0 %1224
        %1226 = vrot.lane.b32.xlu0 %v1217, 124
        %v1227 = vpop.permute.xlu0 %1226
        %1228 = vrot.lane.b32.xlu0 %v1218, 124
        %v1229 = vpop.permute.xlu0 %1228
        %1230 = vrot.lane.b32.xlu0 %v1219, 124
        %v1231 = vpop.permute.xlu0 %1230
        %v1236 = vadd.f32 %v1180, %v1225
        %v1237 = vadd.f32 %v1181, %v1227
        %v1238 = vadd.f32 %v1182, %v1229
        %v1239 = vadd.f32 %v1183, %v1231
        %1244 = vrot.lane.b32.xlu0 %v1236, 32
        %v1245 = vpop.permute.xlu0 %1244
        %1246 = vrot.lane.b32.xlu0 %v1237, 32
        %v1247 = vpop.permute.xlu0 %1246
        %1248 = vrot.lane.b32.xlu0 %v1238, 32
        %v1249 = vpop.permute.xlu0 %1248
        %1250 = vrot.lane.b32.xlu0 %v1239, 32
        %v1251 = vpop.permute.xlu0 %1250
        %v1256 = vsel %vm777, %v1209, %v1245
        %v1257 = vsel %vm777, %v1210, %v1247
        %v1258 = vsel %vm777, %v1211, %v1249
        %v1259 = vsel %vm777, %v1212, %v1251
        %1260 = vst.msk [vmem:[%s335 + $0x8] sm:$0xff] %vm782, %v1256
        %1261 = vst.msk [vmem:[%s335 + $0x18] sm:$0xff] %vm782, %v1257
        %1262 = vst.msk [vmem:[%s335 + $0x28] sm:$0xff] %vm782, %v1258
        %1263 = vst.msk [vmem:[%s335 + $0x38] sm:$0xff] %vm782, %v1259
        %s1264 = sand.u32 %s157, 1
        %s1265 = scalar_lea.sflag [#allocation4], %s1264
        %s1266 = sand.u32 %s157, 1
        %s1267 = smul.addr %s1266, 64
        %s1268 = scalar_lea.vmem [#allocation8], %s1267
        // Predicated region
        $region45: #{tpu_custom_call.1} parent=31 // pred_check
          %p1269 = pneg %p167
        $region46: #{tpu_custom_call.1} parent=31 // pred_check_branch
          %1271 = sbr.rel (%p1269) target = $region48
        $region47: #{tpu_custom_call.1} parent=31 // pred_region
          %s1272 = smul.u32 4, %s32
          %s1273 = smul.u32 2, %s31
          %1275 = vsyncadd %s1265, 0
          %s1276 = smul.addr %s1272, 2
          %s1277 = sadd.s32 %s1273, %s1276
          %s1278 = smul.addr %s30, 8
          %s1279 = sadd.s32 %s1277, %s1278
          %s1280 = smul.addr %s29, 16
          %s1281 = sadd.s32 %s1279, %s1280
          %s1282 = smul.addr %s1281, 8
          %s1283 = scalar_lea.hbm %s3, %s1282
          %s1284 = sshll.u32 %s1268, 4
          %s1285 = int_to_ptr.vmem [resolvable:$true] %s1284
          %s1286 = sshll.u32 %s1283, 4
          %s1287 = int_to_ptr.hbm [resolvable:$true] %s1286
          %1292 = dma.vmem_to_hbm [thread:$0]  %s1285, 1024, %s1287, %s1265, 128, 128, 8
        $region48: #{tpu_custom_call.1} parent=31 // pred_fallthru
          _
      $region32: #{tpu_custom_call.1} parent=5 // pred_fallthru
        _
      %p1293 = scmp.le.s32.totalorder 2, %s18
      // Predicated region
      $region49: #{tpu_custom_call.1} parent=5 // pred_check
        %p1294 = pneg %p1293
      $region50: #{tpu_custom_call.1} parent=5 // pred_check_branch
        %1296 = sbr.rel (%p1294) target = $region52
      $region51: #{tpu_custom_call.1} parent=5 // pred_region
        %s1297 = ssub.s32 %s18, 2
        // Predicated region
        $region53: #{tpu_custom_call.1} parent=51 // pred_check
          %p1298 = pneg %p173
        $region54: #{tpu_custom_call.1} parent=51 // pred_check_branch
          %1300 = sbr.rel (%p1298) target = $region56
        $region55: #{tpu_custom_call.1} parent=51 // pred_region
          %s1301 = sand.u32 %s158, 1
          %s1302 = scalar_lea.sflag [#allocation4], %s1301
          %s1303 = sand.u32 %s158, 1
          %s1304 = smul.addr %s1303, 64
          %s1305 = scalar_lea.vmem [#allocation8], %s1304
          %1307 = dma.done %s1302, 1024
        $region56: #{tpu_custom_call.1} parent=51 // pred_fallthru
          _
      $region52: #{tpu_custom_call.1} parent=5 // pred_fallthru
        _
    $region6: #{tpu_custom_call.1} parent=1 // loop_footer
      %s22 = sadd.s32 1, %s18
    $region7: #{tpu_custom_call.1} parent=1 // loop_footer_branch
      %17 = sbr.rel target = $region3
    $region8: #{tpu_custom_call.1} parent=1 // loop_exit
      _
    %1308 = vsyncpa [#allocation3], 1
    %s1309 = scalar_lea.sflag [#allocation3], 1
    %1310 = vsyncpa %s1309, 1
    %1311 = vsyncpa [#allocation6], 1
    %s1312 = scalar_lea.sflag [#allocation6], 1
    %1313 = vsyncpa %s1312, 1
    %1314 = vsyncpa [#allocation4], 1
    %s1315 = scalar_lea.sflag [#allocation4], 1
    %1316 = vsyncpa %s1315, 1

</llo_original>
